<compile_context>
chip_gen: v5e
topology: v5e:2x2
jax: 0.10.0
libtpu: 0.0.40
codegen_flags: <defaults>
</compile_context>

<pallas_src>
import functools

import jax
import jax.numpy as jnp
from jax.experimental import pallas as pl
from jax.experimental.pallas import tpu as pltpu


HEAD_PAD = 128   # lane-dense padded head width (real head is 3 classes)
OUT_DIM = 3


def _round_up(n, m):
    return ((n + m - 1) // m) * m


def _tpu_kind():
    try:
        dev = jax.devices()[0]
        if dev.platform != "tpu":
            return ""
        return dev.device_kind.lower()
    except Exception:
        return ""


def _is_v5e(kind):
    return ("v5e" in kind) or ("v5 lite" in kind) or ("v5lite" in kind)


def _use_bf16_epilogue(kind):
    # v6e/v7x have bf16-native VPUs: downcasting the accumulator first and doing
    # bias+ReLU in bf16 halves the VALU epilogue vregs (the saturating slot).
    # v5e has no bf16 VPU -> keep the f32 epilogue there (it's MXU-bound anyway).
    return not _is_v5e(kind)


def _choose_batch_tiling(B, kind):
    """Generation-aware batch tile (TB) and padded batch (B_pad)."""
    if _is_v5e(kind):
        pref, min_tiles = 512, 1      # per-step MXU time ~1-4 us -> 512 amortizes
    elif "v6" in kind:
        pref, min_tiles = 1024, 1     # amortize ~0.35 us/step overhead
    else:
        pref, min_tiles = 2048, 2     # v7x/unknown: 2 TCs/chip, ~10 MiB @ TB=2048 fits 64 MiB VMEM

    if B <= 256:
        # Tiny batch: single tile rounded to the 8-row sublane granule
        # (a grid would only add per-step overhead here).
        TB = _round_up(max(B, 1), 8)
        return TB, TB

    n_tiles = max(pl.cdiv(B, pref), min_tiles)
    if min_tiles > 1:
        n_tiles = _round_up(n_tiles, min_tiles)   # even #steps -> balanced TC split
    TB = _round_up(pl.cdiv(B, n_tiles), 8)        # batch-aware: bounds padding waste
    B_pad = _round_up(B, TB)
    return TB, B_pad


def ffnn_kernel(
    x_ref,
    w1_ref, b1_ref,
    w2_ref, b2_ref,
    w3_ref, b3_ref,
    w4_ref, b4_ref,
    w5_ref, b5_ref,
    out_ref,
    *,
    bf16_epilogue,
):
    f32 = jnp.float32
    bf16 = jnp.bfloat16

    def layer(h, w_ref, b_ref, relu):
        acc = jnp.dot(h.astype(bf16), w_ref[...], preferred_element_type=f32)
        if bf16_epilogue:
            acc = acc.astype(bf16)     # downcast first -> bias+ReLU on half the vregs
        acc = acc + b_ref[...]
        if relu:
            acc = jnp.maximum(acc, 0.0)
        return acc

    h = x_ref[...]                        # f32 tile; cast to bf16 inside layer()
    h = layer(h, w1_ref, b1_ref, True)    # Linear(in,256)+ReLU   (Dropout eval = id)
    h = layer(h, w2_ref, b2_ref, True)    # Linear(256,512)+ReLU  (BN1 folded into w2/b2)
    h = layer(h, w3_ref, b3_ref, True)    # Linear(512,256)+ReLU  (BN2 folded)
    h = layer(h, w4_ref, b4_ref, True)    # Linear(256,256)+ReLU  (BN3 folded)
    o = layer(h, w5_ref, b5_ref, False)   # Linear(256,3) padded to 128 lanes (BN4 folded)
    out_ref[...] = o.astype(out_ref.dtype)


def prepare_params(params, *, bf16_epilogue):
    """Fold eval-mode BN affines into the following linear layer, pad the head
    to 128 lanes, cast matmul weights to bf16 (biases bf16 iff bf16 epilogue)."""
    (w1, b1, s1, t1,
     w2, b2, s2, t2,
     w3, b3, s3, t3,
     w4, b4, s4, t4,
     w5, b5) = params

    def fold(s_prev, t_prev, w, b):
        # y = relu(...)*s + t ; z = y @ W + b = relu(...) @ (s[:,None]*W) + (t @ W + b)
        # Exact for any sign of s (the affine sits after the ReLU).
        return s_prev.reshape(-1, 1) * w, b + t_prev @ w

    w2f, b2f = fold(s1, t1, w2, b2)
    w3f, b3f = fold(s2, t2, w3, b3)
    w4f, b4f = fold(s3, t3, w4, b4)
    w5f, b5f = fold(s4, t4, w5, b5)

    # Lane-dense head: pad (256, 3) -> (256, 128), (1, 3) -> (1, 128).
    # NOTE: deliberately NOT padded to 256 ("fill the MXU") -- that would double
    # the already-dominant output writeback for ~4% MXU utilization.
    w5p = jnp.zeros((w5f.shape[0], HEAD_PAD), jnp.float32).at[:, :OUT_DIM].set(w5f)
    b5p = jnp.zeros((1, HEAD_PAD), jnp.float32).at[:, :OUT_DIM].set(b5f)

    bf = jnp.bfloat16
    bias_dt = bf if bf16_epilogue else jnp.float32
    return (
        w1.astype(bf), b1.astype(bias_dt),
        w2f.astype(bf), b2f.astype(bias_dt),
        w3f.astype(bf), b3f.astype(bias_dt),
        w4f.astype(bf), b4f.astype(bias_dt),
        w5p.astype(bf), b5p.astype(bias_dt),
    )


@functools.partial(jax.jit, static_argnames=("bf16_epilogue", "tpu_kind"))
def ffnn_v2_forward(x, prepared, *, bf16_epilogue, tpu_kind=""):
    B, in_dim = x.shape
    TB, B_pad = _choose_batch_tiling(B, tpu_kind)

    # Pad only for divisibility (no wrapper-side cast: x stays f32, the kernel
    # casts the (TB, in_dim) tile to bf16 on-chip).
    x_pad = x if B_pad == B else jnp.pad(x, ((0, B_pad - B), (0, 0)))

    grid = (B_pad // TB,)

    x_spec = pl.BlockSpec((TB, in_dim), lambda i: (i, 0))
    # Weights/biases: constant block index -> stay VMEM-resident, one DMA each.
    param_specs = [pl.BlockSpec(a.shape, lambda i: (0, 0)) for a in prepared]
    out_spec = pl.BlockSpec((TB, HEAD_PAD), lambda i: (i, 0))

    flops = 2 * B_pad * (in_dim * 256 + 256 * 512 + 512 * 256
                         + 256 * 256 + 256 * HEAD_PAD)
    param_bytes = sum(a.size * a.dtype.itemsize for a in prepared)
    bytes_accessed = param_bytes + x_pad.size * 4 + B_pad * HEAD_PAD * 2

    kernel = functools.partial(ffnn_kernel, bf16_epilogue=bf16_epilogue)

    out = pl.pallas_call(
        kernel,
        # bf16 padded output halves the dominant HBM write stream.
        out_shape=jax.ShapeDtypeStruct((B_pad, HEAD_PAD), jnp.bfloat16),
        grid=grid,
        in_specs=[x_spec] + param_specs,
        out_specs=out_spec,
        compiler_params=pltpu.CompilerParams(
            dimension_semantics=("parallel",)),
        cost_estimate=pl.CostEstimate(
            flops=int(flops), transcendentals=0,
            bytes_accessed=int(bytes_accessed)),
    )(x_pad, *prepared)

    return out[:B, :OUT_DIM]


def make_params(key, input_size):
    """Deterministic synthetic parameter init (not a checkpoint load)."""
    dims = [(input_size, 256), (256, 512), (512, 256), (256, 256), (256, 3)]
    keys = jax.random.split(key, 5 * 6)
    params = []
    ki = 0
    for li, (din, dout) in enumerate(dims):
        kw, kb, kg, kbt, kmn, kvr = keys[ki:ki + 6]
        ki += 6
        scale = 1.0 / jnp.sqrt(jnp.float32(din))
        w = jax.random.uniform(kw, (din, dout), jnp.float32, -scale, scale)
        b = jax.random.uniform(kb, (1, dout), jnp.float32, -scale, scale)
        params.extend([w, b])
        if li < 4:  # BatchNorm1d after the first 4 linears (eval mode, pre-folded)
            gamma = 1.0 + 0.1 * jax.random.normal(kg, (1, dout), jnp.float32)
            beta = 0.1 * jax.random.normal(kbt, (1, dout), jnp.float32)
            running_mean = 0.05 * jax.random.normal(kmn, (1, dout), jnp.float32)
            running_var = 0.5 + jax.random.uniform(kvr, (1, dout), jnp.float32)
            eps = 1e-5
            bn_scale = gamma / jnp.sqrt(running_var + eps)
            bn_shift = beta - running_mean * bn_scale
            params.extend([bn_scale, bn_shift])
    return tuple(params)


def reference_forward(x, params):
    """Pure-JAX f32 reference mirroring the PyTorch eval-mode forward."""
    (w1, b1, s1, t1,
     w2, b2, s2, t2,
     w3, b3, s3, t3,
     w4, b4, s4, t4,
     w5, b5) = params
    h = jnp.maximum(x @ w1 + b1, 0.0) * s1 + t1
    h = jnp.maximum(h @ w2 + b2, 0.0) * s2 + t2
    h = jnp.maximum(h @ w3 + b3, 0.0) * s3 + t3
    h = jnp.maximum(h @ w4 + b4, 0.0) * s4 + t4
    return h @ w5 + b5


if __name__ == "__main__":
    key = jax.random.PRNGKey(0)
    kx, kp = jax.random.split(key)

    batch = 8
    input_size = 32
    x = jax.random.normal(kx, (batch, input_size), jnp.float32)
    params = make_params(kp, input_size)

    # TODO(synk): Dropout(0.35)/Dropout(0.1) are identity in eval mode; training-mode
    # stochastic masking (and batch-stat BN) is intentionally not reproduced.

    kind = _tpu_kind()
    bf16_epi = _use_bf16_epilogue(kind)

    prepared = prepare_params(params, bf16_epilogue=bf16_epi)
    out = ffnn_v2_forward(x, prepared, bf16_epilogue=bf16_epi, tpu_kind=kind)
    out = jax.block_until_ready(out)

    ref = reference_forward(x, params)
    assert out.shape == (batch, OUT_DIM), out.shape
    # bf16 MXU operands / bf16 epilogue / bf16 output vs. pure-f32 reference.
    max_err = float(jnp.max(jnp.abs(out.astype(jnp.float32) - ref)))
    assert jnp.allclose(out.astype(jnp.float32), ref, atol=5e-2, rtol=5e-2), max_err

    print("KERNEL_OK")
</pallas_src>

<mosaic_0001>
module attributes {stable_mosaic.version = 11 : i64} {
  func.func @ffnn_kernel(%arg0: i32, %arg1: memref<8x32xf32, #tpu.memory_space<vmem>>, %arg2: memref<32x256xbf16, #tpu.memory_space<vmem>>, %arg3: memref<1x256xbf16, #tpu.memory_space<vmem>>, %arg4: memref<256x512xbf16, #tpu.memory_space<vmem>>, %arg5: memref<1x512xbf16, #tpu.memory_space<vmem>>, %arg6: memref<512x256xbf16, #tpu.memory_space<vmem>>, %arg7: memref<1x256xbf16, #tpu.memory_space<vmem>>, %arg8: memref<256x256xbf16, #tpu.memory_space<vmem>>, %arg9: memref<1x256xbf16, #tpu.memory_space<vmem>>, %arg10: memref<256x128xbf16, #tpu.memory_space<vmem>>, %arg11: memref<1x128xbf16, #tpu.memory_space<vmem>>, %arg12: memref<8x128xbf16, #tpu.memory_space<vmem>>) attributes {dimension_semantics = [#tpu.dimension_semantics<parallel>], iteration_bounds = array<i64: 1>, scalar_prefetch = 0 : i64, scratch_operands = 0 : i64, tpu.core_type = #tpu.core_type<tc>, window_params = [{transform_indices = @transform_0, window_bounds = array<i64: 8, 32>}, {pipeline_mode = #tpu.pipeline_mode<synchronous>, transform_indices = @transform_1, window_bounds = array<i64: 32, 256>}, {pipeline_mode = #tpu.pipeline_mode<synchronous>, transform_indices = @transform_2, window_bounds = array<i64: 1, 256>}, {pipeline_mode = #tpu.pipeline_mode<synchronous>, transform_indices = @transform_3, window_bounds = array<i64: 256, 512>}, {pipeline_mode = #tpu.pipeline_mode<synchronous>, transform_indices = @transform_4, window_bounds = array<i64: 1, 512>}, {pipeline_mode = #tpu.pipeline_mode<synchronous>, transform_indices = @transform_5, window_bounds = array<i64: 512, 256>}, {pipeline_mode = #tpu.pipeline_mode<synchronous>, transform_indices = @transform_6, window_bounds = array<i64: 1, 256>}, {pipeline_mode = #tpu.pipeline_mode<synchronous>, transform_indices = @transform_7, window_bounds = array<i64: 256, 256>}, {pipeline_mode = #tpu.pipeline_mode<synchronous>, transform_indices = @transform_8, window_bounds = array<i64: 1, 256>}, {pipeline_mode = #tpu.pipeline_mode<synchronous>, transform_indices = @transform_9, window_bounds = array<i64: 256, 128>}, {pipeline_mode = #tpu.pipeline_mode<synchronous>, transform_indices = @transform_10, window_bounds = array<i64: 1, 128>}, {transform_indices = @transform_11, window_bounds = array<i64: 8, 128>}]} {
    %c0 = arith.constant 0 : index
    %c0_0 = arith.constant 0 : index
    %0 = vector.load %arg1[%c0, %c0_0] : memref<8x32xf32, #tpu.memory_space<vmem>>, vector<8x32xf32>
    %1 = arith.truncf %0 : vector<8x32xf32> to vector<8x32xbf16>
    %c0_1 = arith.constant 0 : index
    %c0_2 = arith.constant 0 : index
    %2 = vector.load %arg2[%c0_1, %c0_2] : memref<32x256xbf16, #tpu.memory_space<vmem>>, vector<32x256xbf16>
    %cst = arith.constant dense<0.000000e+00> : vector<8x256xf32>
    %3 = tpu.matmul %1, %2, %cst {dimension_numbers = #tpu.dot_dimension_numbers<[1], [0], [0], [1], [0, 0, 1, 1], [], []>} : vector<8x32xbf16>, vector<32x256xbf16>, vector<8x256xf32> -> vector<8x256xf32>
    %4 = arith.truncf %3 : vector<8x256xf32> to vector<8x256xbf16>
    %c0_3 = arith.constant 0 : index
    %c0_4 = arith.constant 0 : index
    %5 = vector.load %arg3[%c0_3, %c0_4] : memref<1x256xbf16, #tpu.memory_space<vmem>>, vector<1x256xbf16>
    %6 = vector.broadcast %5 : vector<1x256xbf16> to vector<8x256xbf16>
    %7 = arith.addf %4, %6 : vector<8x256xbf16>
    %cst_5 = arith.constant 0.000000e+00 : bf16
    %8 = vector.broadcast %cst_5 : bf16 to vector<8x256xbf16>
    %9 = arith.maximumf %7, %8 : vector<8x256xbf16>
    %c0_6 = arith.constant 0 : index
    %c0_7 = arith.constant 0 : index
    %10 = vector.load %arg4[%c0_6, %c0_7] : memref<256x512xbf16, #tpu.memory_space<vmem>>, vector<256x512xbf16>
    %cst_8 = arith.constant dense<0.000000e+00> : vector<8x512xf32>
    %11 = tpu.matmul %9, %10, %cst_8 {dimension_numbers = #tpu.dot_dimension_numbers<[1], [0], [0], [1], [0, 0, 1, 1], [], []>} : vector<8x256xbf16>, vector<256x512xbf16>, vector<8x512xf32> -> vector<8x512xf32>
    %12 = arith.truncf %11 : vector<8x512xf32> to vector<8x512xbf16>
    %c0_9 = arith.constant 0 : index
    %c0_10 = arith.constant 0 : index
    %13 = vector.load %arg5[%c0_9, %c0_10] : memref<1x512xbf16, #tpu.memory_space<vmem>>, vector<1x512xbf16>
    %14 = vector.broadcast %13 : vector<1x512xbf16> to vector<8x512xbf16>
    %15 = arith.addf %12, %14 : vector<8x512xbf16>
    %cst_11 = arith.constant 0.000000e+00 : bf16
    %16 = vector.broadcast %cst_11 : bf16 to vector<8x512xbf16>
    %17 = arith.maximumf %15, %16 : vector<8x512xbf16>
    %c0_12 = arith.constant 0 : index
    %c0_13 = arith.constant 0 : index
    %18 = vector.load %arg6[%c0_12, %c0_13] : memref<512x256xbf16, #tpu.memory_space<vmem>>, vector<512x256xbf16>
    %cst_14 = arith.constant dense<0.000000e+00> : vector<8x256xf32>
    %19 = tpu.matmul %17, %18, %cst_14 {dimension_numbers = #tpu.dot_dimension_numbers<[1], [0], [0], [1], [0, 0, 1, 1], [], []>} : vector<8x512xbf16>, vector<512x256xbf16>, vector<8x256xf32> -> vector<8x256xf32>
    %20 = arith.truncf %19 : vector<8x256xf32> to vector<8x256xbf16>
    %c0_15 = arith.constant 0 : index
    %c0_16 = arith.constant 0 : index
    %21 = vector.load %arg7[%c0_15, %c0_16] : memref<1x256xbf16, #tpu.memory_space<vmem>>, vector<1x256xbf16>
    %22 = vector.broadcast %21 : vector<1x256xbf16> to vector<8x256xbf16>
    %23 = arith.addf %20, %22 : vector<8x256xbf16>
    %cst_17 = arith.constant 0.000000e+00 : bf16
    %24 = vector.broadcast %cst_17 : bf16 to vector<8x256xbf16>
    %25 = arith.maximumf %23, %24 : vector<8x256xbf16>
    %c0_18 = arith.constant 0 : index
    %c0_19 = arith.constant 0 : index
    %26 = vector.load %arg8[%c0_18, %c0_19] : memref<256x256xbf16, #tpu.memory_space<vmem>>, vector<256x256xbf16>
    %cst_20 = arith.constant dense<0.000000e+00> : vector<8x256xf32>
    %27 = tpu.matmul %25, %26, %cst_20 {dimension_numbers = #tpu.dot_dimension_numbers<[1], [0], [0], [1], [0, 0, 1, 1], [], []>} : vector<8x256xbf16>, vector<256x256xbf16>, vector<8x256xf32> -> vector<8x256xf32>
    %28 = arith.truncf %27 : vector<8x256xf32> to vector<8x256xbf16>
    %c0_21 = arith.constant 0 : index
    %c0_22 = arith.constant 0 : index
    %29 = vector.load %arg9[%c0_21, %c0_22] : memref<1x256xbf16, #tpu.memory_space<vmem>>, vector<1x256xbf16>
    %30 = vector.broadcast %29 : vector<1x256xbf16> to vector<8x256xbf16>
    %31 = arith.addf %28, %30 : vector<8x256xbf16>
    %cst_23 = arith.constant 0.000000e+00 : bf16
    %32 = vector.broadcast %cst_23 : bf16 to vector<8x256xbf16>
    %33 = arith.maximumf %31, %32 : vector<8x256xbf16>
    %c0_24 = arith.constant 0 : index
    %c0_25 = arith.constant 0 : index
    %34 = vector.load %arg10[%c0_24, %c0_25] : memref<256x128xbf16, #tpu.memory_space<vmem>>, vector<256x128xbf16>
    %cst_26 = arith.constant dense<0.000000e+00> : vector<8x128xf32>
    %35 = tpu.matmul %33, %34, %cst_26 {dimension_numbers = #tpu.dot_dimension_numbers<[1], [0], [0], [1], [0, 0, 1, 1], [], []>} : vector<8x256xbf16>, vector<256x128xbf16>, vector<8x128xf32> -> vector<8x128xf32>
    %36 = arith.truncf %35 : vector<8x128xf32> to vector<8x128xbf16>
    %c0_27 = arith.constant 0 : index
    %c0_28 = arith.constant 0 : index
    %37 = vector.load %arg11[%c0_27, %c0_28] : memref<1x128xbf16, #tpu.memory_space<vmem>>, vector<1x128xbf16>
    %38 = vector.broadcast %37 : vector<1x128xbf16> to vector<8x128xbf16>
    %39 = arith.addf %36, %38 : vector<8x128xbf16>
    %c0_29 = arith.constant 0 : index
    %c0_30 = arith.constant 0 : index
    %40 = vector.load %arg12[%c0_29, %c0_30] : memref<8x128xbf16, #tpu.memory_space<vmem>>, vector<8x128xbf16>
    tpu.vector_store %arg12[%c0_29, %c0_30], %39 {strides = array<i32>} : memref<8x128xbf16, #tpu.memory_space<vmem>>, vector<8x128xbf16>,
    return
  }
  func.func @transform_0(%arg0: i32) -> (i32, i32) {
    %c0_i32 = arith.constant 0 : i32
    %c0_i32_0 = arith.constant 0 : i32
    return %arg0, %c0_i32 : i32, i32
  }
  func.func @transform_1(%arg0: i32) -> (i32, i32) {
    %c0_i32 = arith.constant 0 : i32
    %c0_i32_0 = arith.constant 0 : i32
    %c0_i32_1 = arith.constant 0 : i32
    return %c0_i32, %c0_i32_0 : i32, i32
  }
  func.func @transform_2(%arg0: i32) -> (i32, i32) {
    %c0_i32 = arith.constant 0 : i32
    %c0_i32_0 = arith.constant 0 : i32
    %c0_i32_1 = arith.constant 0 : i32
    return %c0_i32, %c0_i32_0 : i32, i32
  }
  func.func @transform_3(%arg0: i32) -> (i32, i32) {
    %c0_i32 = arith.constant 0 : i32
    %c0_i32_0 = arith.constant 0 : i32
    %c0_i32_1 = arith.constant 0 : i32
    return %c0_i32, %c0_i32_0 : i32, i32
  }
  func.func @transform_4(%arg0: i32) -> (i32, i32) {
    %c0_i32 = arith.constant 0 : i32
    %c0_i32_0 = arith.constant 0 : i32
    %c0_i32_1 = arith.constant 0 : i32
    return %c0_i32, %c0_i32_0 : i32, i32
  }
  func.func @transform_5(%arg0: i32) -> (i32, i32) {
    %c0_i32 = arith.constant 0 : i32
    %c0_i32_0 = arith.constant 0 : i32
    %c0_i32_1 = arith.constant 0 : i32
    return %c0_i32, %c0_i32_0 : i32, i32
  }
  func.func @transform_6(%arg0: i32) -> (i32, i32) {
    %c0_i32 = arith.constant 0 : i32
    %c0_i32_0 = arith.constant 0 : i32
    %c0_i32_1 = arith.constant 0 : i32
    return %c0_i32, %c0_i32_0 : i32, i32
  }
  func.func @transform_7(%arg0: i32) -> (i32, i32) {
    %c0_i32 = arith.constant 0 : i32
    %c0_i32_0 = arith.constant 0 : i32
    %c0_i32_1 = arith.constant 0 : i32
    return %c0_i32, %c0_i32_0 : i32, i32
  }
  func.func @transform_8(%arg0: i32) -> (i32, i32) {
    %c0_i32 = arith.constant 0 : i32
    %c0_i32_0 = arith.constant 0 : i32
    %c0_i32_1 = arith.constant 0 : i32
    return %c0_i32, %c0_i32_0 : i32, i32
  }
  func.func @transform_9(%arg0: i32) -> (i32, i32) {
    %c0_i32 = arith.constant 0 : i32
    %c0_i32_0 = arith.constant 0 : i32
    %c0_i32_1 = arith.constant 0 : i32
    return %c0_i32, %c0_i32_0 : i32, i32
  }
  func.func @transform_10(%arg0: i32) -> (i32, i32) {
    %c0_i32 = arith.constant 0 : i32
    %c0_i32_0 = arith.constant 0 : i32
    %c0_i32_1 = arith.constant 0 : i32
    return %c0_i32, %c0_i32_0 : i32, i32
  }
  func.func @transform_11(%arg0: i32) -> (i32, i32) {
    %c0_i32 = arith.constant 0 : i32
    %c0_i32_0 = arith.constant 0 : i32
    return %arg0, %c0_i32 : i32, i32
  }
}

</mosaic_0001>

<llo_original>
// kernel: ffnn_v2_forward.1
$region0: #{ffnn_v2_forward.1}
  #allocation0 [shape = 'u32[]', space=smem, size = 0x4, offset = 0x4, fixed_abs, tag = 'smem constant byte address 0x4 - core index']
  #allocation1 [shape = 'u32[72,128]{1,0:T(1,128)}', space=vmem, size = 0x9000, scoped, tag = 'internal scratch']
  %s0 = inlined_call_operand.hbm [shape: f32[8,32], index: 0, kind: input, shape index: {}]
  %s1 = inlined_call_operand.hbm [shape: bf16[32,256], index: 1, kind: input, shape index: {}]
  %s2 = inlined_call_operand.hbm [shape: bf16[1,256], index: 2, kind: input, shape index: {}]
  %s3 = inlined_call_operand.hbm [shape: bf16[256,512], index: 3, kind: input, shape index: {}]
  %s4 = inlined_call_operand.hbm [shape: bf16[1,512], index: 4, kind: input, shape index: {}]
  %s5 = inlined_call_operand.hbm [shape: bf16[512,256], index: 5, kind: input, shape index: {}]
  %s6 = inlined_call_operand.vmem [shape: bf16[1,256], index: 6, kind: input, shape index: {}]
  %s7 = inlined_call_operand.hbm [shape: bf16[256,256], index: 7, kind: input, shape index: {}]
  %s8 = inlined_call_operand.vmem [shape: bf16[1,256], index: 8, kind: input, shape index: {}]
  %s9 = inlined_call_operand.hbm [shape: bf16[256,128], index: 9, kind: input, shape index: {}]
  %s10 = inlined_call_operand.vmem [shape: bf16[1,128], index: 10, kind: input, shape index: {}]
  %s11 = inlined_call_operand.vmem [shape: bf16[8,128], index: 11, kind: output, shape index: {}]
  %s12 = sld [smem:[#allocation0]]
  $region86: #{ffnn_v2_forward.1} parent=0
    _
  %s14 = ssub.s32 1, %s12
  %s15 = scalar_select 0, %s14, %s12
  $region1: #{ffnn_v2_forward.1} parent=0
    #allocation2 [shape = 'u8[4096]{0}', space=vmem, size = 0x1000, scoped, tag = 'input window, operand 0, single buffered']
    #allocation3 [shape = 's32[1]{0}', space=sflag, size = 0x4, scoped, tag = 'scoped memory for ffnn_v2_forward.1']
    #allocation4 [shape = 'u8[16384]{0}', space=vmem, size = 0x4000, scoped, tag = 'input window, operand 1, single buffered']
    #allocation5 [shape = 's32[1]{0}', space=sflag, size = 0x4, scoped, tag = 'scoped memory for ffnn_v2_forward.1']
    #allocation6 [shape = 'u8[1024]{0}', space=vmem, size = 0x400, scoped, tag = 'input window, operand 2, single buffered']
    #allocation7 [shape = 'u8[262144]{0}', space=vmem, size = 0x40000, scoped, tag = 'input window, operand 3, single buffered']
    #allocation8 [shape = 's32[1]{0}', space=sflag, size = 0x4, scoped, tag = 'scoped memory for ffnn_v2_forward.1']
    #allocation9 [shape = 'u8[2048]{0}', space=vmem, size = 0x800, scoped, tag = 'input window, operand 4, single buffered']
    #allocation10 [shape = 'u8[262144]{0}', space=vmem, size = 0x40000, scoped, tag = 'input window, operand 5, single buffered']
    #allocation11 [shape = 's32[1]{0}', space=sflag, size = 0x4, scoped, tag = 'scoped memory for ffnn_v2_forward.1']
    #allocation12 [shape = 'u8[131072]{0}', space=vmem, size = 0x20000, scoped, tag = 'input window, operand 7, single buffered']
    #allocation13 [shape = 'u8[65536]{0}', space=vmem, size = 0x10000, scoped, tag = 'input window, operand 9, single buffered']
    #allocation14 [shape = 's32[1]{0}', space=sflag, size = 0x4, scoped, tag = 'scoped memory for ffnn_v2_forward.1']
    %16 = vsyncpa [#allocation3], 0
    %17 = vsyncpa [#allocation5], 0
    %18 = vsyncpa [#allocation8], 0
    %19 = vsyncpa [#allocation11], 0
    %20 = vsyncpa [#allocation14], 0
    // Predicated region
    $region2: #{ffnn_v2_forward.1} parent=1 // pred_check
      _
    $region3: #{ffnn_v2_forward.1} parent=1 // pred_check_branch
      %22 = sbr.rel (0) target = $region5
    $region4: #{ffnn_v2_forward.1} parent=1 // pred_region
      %24 = vsyncadd [#allocation3], 0
      %s26 = sshll.u32 %s0, 4
      %s27 = int_to_ptr.hbm [resolvable:$true] %s26
      %s28 = sshll.u32 [#allocation2], 4
      %s29 = int_to_ptr.vmem [resolvable:$true] %s28
      %31 = dma.hbm_to_vmem [thread:$0]  %s27, 128, %s29, [#allocation3]
    $region5: #{ffnn_v2_forward.1} parent=1 // pred_fallthru
      _
    // Predicated region
    $region6: #{ffnn_v2_forward.1} parent=1 // pred_check
      _
    $region7: #{ffnn_v2_forward.1} parent=1 // pred_check_branch
      %33 = sbr.rel (0) target = $region9
    $region8: #{ffnn_v2_forward.1} parent=1 // pred_region
      %35 = vsyncadd [#allocation5], 0
      %s36 = sshll.u32 %s1, 4
      %s37 = int_to_ptr.hbm [resolvable:$true] %s36
      %s38 = sshll.u32 [#allocation4], 4
      %s39 = int_to_ptr.vmem [resolvable:$true] %s38
      %44 = dma.hbm_to_vmem [thread:$0]  %s37, 512, %s39, [#allocation5], 128, 128, 8
    $region9: #{ffnn_v2_forward.1} parent=1 // pred_fallthru
      _
    // Predicated region
    $region10: #{ffnn_v2_forward.1} parent=1 // pred_check
      _
    $region11: #{ffnn_v2_forward.1} parent=1 // pred_check_branch
      %46 = sbr.rel (0) target = $region13
    $region12: #{ffnn_v2_forward.1} parent=1 // pred_region
      %48 = vsyncadd [#allocation5], 0
      %s50 = sshll.u32 %s2, 4
      %s51 = int_to_ptr.hbm [resolvable:$true] %s50
      %s52 = sshll.u32 [#allocation6], 4
      %s53 = int_to_ptr.vmem [resolvable:$true] %s52
      %55 = dma.hbm_to_vmem [thread:$0]  %s51, 32, %s53, [#allocation5]
    $region13: #{ffnn_v2_forward.1} parent=1 // pred_fallthru
      _
    // Predicated region
    $region14: #{ffnn_v2_forward.1} parent=1 // pred_check
      _
    $region15: #{ffnn_v2_forward.1} parent=1 // pred_check_branch
      %57 = sbr.rel (0) target = $region17
    $region16: #{ffnn_v2_forward.1} parent=1 // pred_region
      %59 = vsyncadd [#allocation8], 0
      %s60 = sshll.u32 %s3, 4
      %s61 = int_to_ptr.hbm [resolvable:$true] %s60
      %s62 = sshll.u32 [#allocation7], 4
      %s63 = int_to_ptr.vmem [resolvable:$true] %s62
      %68 = dma.hbm_to_vmem [thread:$0]  %s61, 8192, %s63, [#allocation8], 256, 256, 16
    $region17: #{ffnn_v2_forward.1} parent=1 // pred_fallthru
      _
    // Predicated region
    $region18: #{ffnn_v2_forward.1} parent=1 // pred_check
      _
    $region19: #{ffnn_v2_forward.1} parent=1 // pred_check_branch
      %70 = sbr.rel (0) target = $region21
    $region20: #{ffnn_v2_forward.1} parent=1 // pred_region
      %72 = vsyncadd [#allocation8], 0
      %s74 = sshll.u32 %s4, 4
      %s75 = int_to_ptr.hbm [resolvable:$true] %s74
      %s76 = sshll.u32 [#allocation9], 4
      %s77 = int_to_ptr.vmem [resolvable:$true] %s76
      %79 = dma.hbm_to_vmem [thread:$0]  %s75, 64, %s77, [#allocation8]
    $region21: #{ffnn_v2_forward.1} parent=1 // pred_fallthru
      _
    // Predicated region
    $region22: #{ffnn_v2_forward.1} parent=1 // pred_check
      _
    $region23: #{ffnn_v2_forward.1} parent=1 // pred_check_branch
      %81 = sbr.rel (0) target = $region25
    $region24: #{ffnn_v2_forward.1} parent=1 // pred_region
      %83 = vsyncadd [#allocation11], 0
      %s84 = sshll.u32 %s5, 4
      %s85 = int_to_ptr.hbm [resolvable:$true] %s84
      %s86 = sshll.u32 [#allocation10], 4
      %s87 = int_to_ptr.vmem [resolvable:$true] %s86
      %92 = dma.hbm_to_vmem [thread:$0]  %s85, 8192, %s87, [#allocation11], 128, 128, 8
    $region25: #{ffnn_v2_forward.1} parent=1 // pred_fallthru
      _
    // Predicated region
    $region26: #{ffnn_v2_forward.1} parent=1 // pred_check
      _
    $region27: #{ffnn_v2_forward.1} parent=1 // pred_check_branch
      %94 = sbr.rel (0) target = $region29
    $region28: #{ffnn_v2_forward.1} parent=1 // pred_region
      _
    $region29: #{ffnn_v2_forward.1} parent=1 // pred_fallthru
      _
    // Predicated region
    $region30: #{ffnn_v2_forward.1} parent=1 // pred_check
      _
    $region31: #{ffnn_v2_forward.1} parent=1 // pred_check_branch
      %96 = sbr.rel (0) target = $region33
    $region32: #{ffnn_v2_forward.1} parent=1 // pred_region
      %98 = vsyncadd [#allocation11], 0
      %s99 = sshll.u32 %s7, 4
      %s100 = int_to_ptr.hbm [resolvable:$true] %s99
      %s101 = sshll.u32 [#allocation12], 4
      %s102 = int_to_ptr.vmem [resolvable:$true] %s101
      %107 = dma.hbm_to_vmem [thread:$0]  %s100, 4096, %s102, [#allocation11], 128, 128, 8
    $region33: #{ffnn_v2_forward.1} parent=1 // pred_fallthru
      _
    // Predicated region
    $region34: #{ffnn_v2_forward.1} parent=1 // pred_check
      _
    $region35: #{ffnn_v2_forward.1} parent=1 // pred_check_branch
      %109 = sbr.rel (0) target = $region37
    $region36: #{ffnn_v2_forward.1} parent=1 // pred_region
      _
    $region37: #{ffnn_v2_forward.1} parent=1 // pred_fallthru
      _
    // Predicated region
    $region38: #{ffnn_v2_forward.1} parent=1 // pred_check
      _
    $region39: #{ffnn_v2_forward.1} parent=1 // pred_check_branch
      %111 = sbr.rel (0) target = $region41
    $region40: #{ffnn_v2_forward.1} parent=1 // pred_region
      %113 = vsyncadd [#allocation14], 0
      %s114 = sshll.u32 %s9, 4
      %s115 = int_to_ptr.hbm [resolvable:$true] %s114
      %s116 = sshll.u32 [#allocation13], 4
      %s117 = int_to_ptr.vmem [resolvable:$true] %s116
      %122 = dma.hbm_to_vmem [thread:$0]  %s115, 2048, %s117, [#allocation14], 64, 64, 4
    $region41: #{ffnn_v2_forward.1} parent=1 // pred_fallthru
      _
    // Predicated region
    $region42: #{ffnn_v2_forward.1} parent=1 // pred_check
      _
    $region43: #{ffnn_v2_forward.1} parent=1 // pred_check_branch
      %124 = sbr.rel (0) target = $region45
    $region44: #{ffnn_v2_forward.1} parent=1 // pred_region
      _
    $region45: #{ffnn_v2_forward.1} parent=1 // pred_fallthru
      _
    // Predicated region
    $region46: #{ffnn_v2_forward.1} parent=1 // pred_check
      _
    $region47: #{ffnn_v2_forward.1} parent=1 // pred_check_branch
      %126 = sbr.rel (0) target = $region49
    $region48: #{ffnn_v2_forward.1} parent=1 // pred_region
      %128 = dma.done [#allocation3], 128
    $region49: #{ffnn_v2_forward.1} parent=1 // pred_fallthru
      _
    // Predicated region
    $region50: #{ffnn_v2_forward.1} parent=1 // pred_check
      _
    $region51: #{ffnn_v2_forward.1} parent=1 // pred_check_branch
      %130 = sbr.rel (0) target = $region53
    $region52: #{ffnn_v2_forward.1} parent=1 // pred_region
      %132 = dma.done [#allocation5], 512
    $region53: #{ffnn_v2_forward.1} parent=1 // pred_fallthru
      _
    // Predicated region
    $region54: #{ffnn_v2_forward.1} parent=1 // pred_check
      _
    $region55: #{ffnn_v2_forward.1} parent=1 // pred_check_branch
      %134 = sbr.rel (0) target = $region57
    $region56: #{ffnn_v2_forward.1} parent=1 // pred_region
      %136 = dma.done [#allocation5], 32
    $region57: #{ffnn_v2_forward.1} parent=1 // pred_fallthru
      _
    // Predicated region
    $region58: #{ffnn_v2_forward.1} parent=1 // pred_check
      _
    $region59: #{ffnn_v2_forward.1} parent=1 // pred_check_branch
      %138 = sbr.rel (0) target = $region61
    $region60: #{ffnn_v2_forward.1} parent=1 // pred_region
      %140 = dma.done [#allocation8], 8192
    $region61: #{ffnn_v2_forward.1} parent=1 // pred_fallthru
      _
    // Predicated region
    $region62: #{ffnn_v2_forward.1} parent=1 // pred_check
      _
    $region63: #{ffnn_v2_forward.1} parent=1 // pred_check_branch
      %142 = sbr.rel (0) target = $region65
    $region64: #{ffnn_v2_forward.1} parent=1 // pred_region
      %144 = dma.done [#allocation8], 64
    $region65: #{ffnn_v2_forward.1} parent=1 // pred_fallthru
      _
    // Predicated region
    $region66: #{ffnn_v2_forward.1} parent=1 // pred_check
      _
    $region67: #{ffnn_v2_forward.1} parent=1 // pred_check_branch
      %146 = sbr.rel (0) target = $region69
    $region68: #{ffnn_v2_forward.1} parent=1 // pred_region
      %148 = dma.done [#allocation11], 8192
    $region69: #{ffnn_v2_forward.1} parent=1 // pred_fallthru
      _
    // Predicated region
    $region70: #{ffnn_v2_forward.1} parent=1 // pred_check
      _
    $region71: #{ffnn_v2_forward.1} parent=1 // pred_check_branch
      %150 = sbr.rel (0) target = $region73
    $region72: #{ffnn_v2_forward.1} parent=1 // pred_region
      %152 = dma.done [#allocation11], 4096
    $region73: #{ffnn_v2_forward.1} parent=1 // pred_fallthru
      _
    // Predicated region
    $region74: #{ffnn_v2_forward.1} parent=1 // pred_check
      _
    $region75: #{ffnn_v2_forward.1} parent=1 // pred_check_branch
      %154 = sbr.rel (0) target = $region77
    $region76: #{ffnn_v2_forward.1} parent=1 // pred_region
      %156 = dma.done [#allocation14], 2048
    $region77: #{ffnn_v2_forward.1} parent=1 // pred_fallthru
      _
    %v158 = vld [vmem:[#allocation2] sm:$0xff]
    %v159 = vpack.c.bf16 %v158, %v158
    %v160 = vld [vmem:[#allocation4] sm:$0xff]
    %v161 = vld [vmem:[#allocation4 + $0x8] sm:$0xff]
    %v162 = vld [vmem:[#allocation4 + $0x10] sm:$0xff]
    %v163 = vld [vmem:[#allocation4 + $0x18] sm:$0xff]
    %v168 = vunpack.c.l.b16 %v160
    %v169 = vunpack.c.h.b16 %v160
    %v170 = vunpack.c.l.b16 %v161
    %v171 = vunpack.c.h.b16 %v161
    %v172 = vunpack.c.l.b16 %v162
    %v173 = vunpack.c.h.b16 %v162
    %v174 = vunpack.c.l.b16 %v163
    %v175 = vunpack.c.h.b16 %v163
    %v176 = vpack.c.b16 %v170, %v168
    %v177 = vpack.c.b16 %v171, %v169
    %v178 = vpack.c.b16 %v174, %v172
    %v179 = vpack.c.b16 %v175, %v173
    %vm184 = vcmask 261120
    %v186 = vsel %vm184, %v159, 0
    %188 = vmatpush.bf16.msra.mxu0 0
    %189 = vmatpush.bf16.msra.mxu0 0
    %190 = vmatpush.bf16.msra.mxu0 0
    %191 = vmatpush.bf16.msra.mxu0 0
    %192 = vmatpush.bf16.msra.mxu0 0
    %193 = vmatpush.bf16.msra.mxu0 0
    %194 = vmatpush.bf16.msra.mxu0 %v178
    %195 = vmatpush.bf16.msra.mxu0 %v176
    %196 = vmatmul.bf16.gmra.mxu0 %v186
    %v197 = vpop.f32.mrf.mxu0
    %v198 = vadd.f32 0.0, %v197
    %v199 = vpop.f32.mrf.mxu0
    %200 = vdwg.mxu0
    %201 = vmatpush.bf16.msra.mxu0 0
    %202 = vmatpush.bf16.msra.mxu0 0
    %203 = vmatpush.bf16.msra.mxu0 0
    %204 = vmatpush.bf16.msra.mxu0 0
    %205 = vmatpush.bf16.msra.mxu0 0
    %206 = vmatpush.bf16.msra.mxu0 0
    %207 = vmatpush.bf16.msra.mxu0 %v179
    %208 = vmatpush.bf16.msra.mxu0 %v177
    %209 = vmatmul.bf16.gmra.mxu0 %v186
    %v210 = vpop.f32.mrf.mxu0
    %v211 = vadd.f32 0.0, %v210
    %v212 = vpop.f32.mrf.mxu0
    %213 = vdwg.mxu0
    %v214 = vpack.c.bf16 %v211, %v198
    %v215 = vld [vmem:[#allocation6] sm:$0x3]
    %217 = vst [vmem:[#allocation1] ss:$9 sm:$0xff] %v215
    %v218 = vld [vmem:[#allocation1] sm:$0xff]
    %v219 = vld [vmem:[#allocation1 + $0x9] sm:$0xff]
    %v220 = vpack.i.b16 %v218, %v218
    %v222 = vperm.slane %v220, 0
    %v223 = vpack.i.b16 %v219, %v219
    %v225 = vperm.slane %v223, 0
    %v226 = vunpack.c.l.bf16 %v214
    %v227 = vunpack.c.h.bf16 %v214
    %v228 = vunpack.c.l.bf16 %v222
    %v229 = vunpack.c.l.bf16 %v225
    %v230 = vadd.f32 %v226, %v228
    %v231 = vadd.f32 %v227, %v229
    %v232 = vpack.c.bf16 %v231, %v230
    %v233 = vunpack.c.l.bf16 %v232
    %v234 = vunpack.c.h.bf16 %v232
    %v235 = vmax.f32 %v233, 0.0
    %v236 = vmax.f32 %v234, 0.0
    %v237 = vpack.c.bf16 %v235, %v235
    %v238 = vpack.c.bf16 %v236, %v236
    %v239 = vld [vmem:[#allocation7] sm:$0xff]
    %v240 = vld [vmem:[#allocation7 + $0x8] sm:$0xff]
    %v241 = vld [vmem:[#allocation7 + $0x10] sm:$0xff]
    %v242 = vld [vmem:[#allocation7 + $0x18] sm:$0xff]
    %v243 = vld [vmem:[#allocation7 + $0x20] sm:$0xff]
    %v244 = vld [vmem:[#allocation7 + $0x28] sm:$0xff]
    %v245 = vld [vmem:[#allocation7 + $0x30] sm:$0xff]
    %v246 = vld [vmem:[#allocation7 + $0x38] sm:$0xff]
    %v247 = vld [vmem:[#allocation7 + $0x40] sm:$0xff]
    %v248 = vld [vmem:[#allocation7 + $0x48] sm:$0xff]
    %v249 = vld [vmem:[#allocation7 + $0x50] sm:$0xff]
    %v250 = vld [vmem:[#allocation7 + $0x58] sm:$0xff]
    %v251 = vld [vmem:[#allocation7 + $0x60] sm:$0xff]
    %v252 = vld [vmem:[#allocation7 + $0x68] sm:$0xff]
    %v253 = vld [vmem:[#allocation7 + $0x70] sm:$0xff]
    %v254 = vld [vmem:[#allocation7 + $0x78] sm:$0xff]
    %v255 = vld [vmem:[#allocation7 + $0x80] sm:$0xff]
    %v256 = vld [vmem:[#allocation7 + $0x88] sm:$0xff]
    %v257 = vld [vmem:[#allocation7 + $0x90] sm:$0xff]
    %v258 = vld [vmem:[#allocation7 + $0x98] sm:$0xff]
    %v259 = vld [vmem:[#allocation7 + $0xa0] sm:$0xff]
    %v260 = vld [vmem:[#allocation7 + $0xa8] sm:$0xff]
    %v261 = vld [vmem:[#allocation7 + $0xb0] sm:$0xff]
    %v262 = vld [vmem:[#allocation7 + $0xb8] sm:$0xff]
    %v263 = vld [vmem:[#allocation7 + $0xc0] sm:$0xff]
    %v264 = vld [vmem:[#allocation7 + $0xc8] sm:$0xff]
    %v265 = vld [vmem:[#allocation7 + $0xd0] sm:$0xff]
    %v266 = vld [vmem:[#allocation7 + $0xd8] sm:$0xff]
    %v267 = vld [vmem:[#allocation7 + $0xe0] sm:$0xff]
    %v268 = vld [vmem:[#allocation7 + $0xe8] sm:$0xff]
    %v269 = vld [vmem:[#allocation7 + $0xf0] sm:$0xff]
    %v270 = vld [vmem:[#allocation7 + $0xf8] sm:$0xff]
    %v271 = vld [vmem:[#allocation7 + $0x100] sm:$0xff]
    %v272 = vld [vmem:[#allocation7 + $0x108] sm:$0xff]
    %v273 = vld [vmem:[#allocation7 + $0x110] sm:$0xff]
    %v274 = vld [vmem:[#allocation7 + $0x118] sm:$0xff]
    %v275 = vld [vmem:[#allocation7 + $0x120] sm:$0xff]
    %v276 = vld [vmem:[#allocation7 + $0x128] sm:$0xff]
    %v277 = vld [vmem:[#allocation7 + $0x130] sm:$0xff]
    %v278 = vld [vmem:[#allocation7 + $0x138] sm:$0xff]
    %v279 = vld [vmem:[#allocation7 + $0x140] sm:$0xff]
    %v280 = vld [vmem:[#allocation7 + $0x148] sm:$0xff]
    %v281 = vld [vmem:[#allocation7 + $0x150] sm:$0xff]
    %v282 = vld [vmem:[#allocation7 + $0x158] sm:$0xff]
    %v283 = vld [vmem:[#allocation7 + $0x160] sm:$0xff]
    %v284 = vld [vmem:[#allocation7 + $0x168] sm:$0xff]
    %v285 = vld [vmem:[#allocation7 + $0x170] sm:$0xff]
    %v286 = vld [vmem:[#allocation7 + $0x178] sm:$0xff]
    %v287 = vld [vmem:[#allocation7 + $0x180] sm:$0xff]
    %v288 = vld [vmem:[#allocation7 + $0x188] sm:$0xff]
    %v289 = vld [vmem:[#allocation7 + $0x190] sm:$0xff]
    %v290 = vld [vmem:[#allocation7 + $0x198] sm:$0xff]
    %v291 = vld [vmem:[#allocation7 + $0x1a0] sm:$0xff]
    %v292 = vld [vmem:[#allocation7 + $0x1a8] sm:$0xff]
    %v293 = vld [vmem:[#allocation7 + $0x1b0] sm:$0xff]
    %v294 = vld [vmem:[#allocation7 + $0x1b8] sm:$0xff]
    %v295 = vld [vmem:[#allocation7 + $0x1c0] sm:$0xff]
    %v296 = vld [vmem:[#allocation7 + $0x1c8] sm:$0xff]
    %v297 = vld [vmem:[#allocation7 + $0x1d0] sm:$0xff]
    %v298 = vld [vmem:[#allocation7 + $0x1d8] sm:$0xff]
    %v299 = vld [vmem:[#allocation7 + $0x1e0] sm:$0xff]
    %v300 = vld [vmem:[#allocation7 + $0x1e8] sm:$0xff]
    %v301 = vld [vmem:[#allocation7 + $0x1f0] sm:$0xff]
    %v302 = vld [vmem:[#allocation7 + $0x1f8] sm:$0xff]
    %v367 = vunpack.c.l.b16 %v239
    %v368 = vunpack.c.h.b16 %v239
    %v369 = vunpack.c.l.b16 %v240
    %v370 = vunpack.c.h.b16 %v240
    %v371 = vunpack.c.l.b16 %v241
    %v372 = vunpack.c.h.b16 %v241
    %v373 = vunpack.c.l.b16 %v242
    %v374 = vunpack.c.h.b16 %v242
    %v375 = vunpack.c.l.b16 %v243
    %v376 = vunpack.c.h.b16 %v243
    %v377 = vunpack.c.l.b16 %v244
    %v378 = vunpack.c.h.b16 %v244
    %v379 = vunpack.c.l.b16 %v245
    %v380 = vunpack.c.h.b16 %v245
    %v381 = vunpack.c.l.b16 %v246
    %v382 = vunpack.c.h.b16 %v246
    %v383 = vunpack.c.l.b16 %v247
    %v384 = vunpack.c.h.b16 %v247
    %v385 = vunpack.c.l.b16 %v248
    %v386 = vunpack.c.h.b16 %v248
    %v387 = vunpack.c.l.b16 %v249
    %v388 = vunpack.c.h.b16 %v249
    %v389 = vunpack.c.l.b16 %v250
    %v390 = vunpack.c.h.b16 %v250
    %v391 = vunpack.c.l.b16 %v251
    %v392 = vunpack.c.h.b16 %v251
    %v393 = vunpack.c.l.b16 %v252
    %v394 = vunpack.c.h.b16 %v252
    %v395 = vunpack.c.l.b16 %v253
    %v396 = vunpack.c.h.b16 %v253
    %v397 = vunpack.c.l.b16 %v254
    %v398 = vunpack.c.h.b16 %v254
    %v399 = vunpack.c.l.b16 %v255
    %v400 = vunpack.c.h.b16 %v255
    %v401 = vunpack.c.l.b16 %v256
    %v402 = vunpack.c.h.b16 %v256
    %v403 = vunpack.c.l.b16 %v257
    %v404 = vunpack.c.h.b16 %v257
    %v405 = vunpack.c.l.b16 %v258
    %v406 = vunpack.c.h.b16 %v258
    %v407 = vunpack.c.l.b16 %v259
    %v408 = vunpack.c.h.b16 %v259
    %v409 = vunpack.c.l.b16 %v260
    %v410 = vunpack.c.h.b16 %v260
    %v411 = vunpack.c.l.b16 %v261
    %v412 = vunpack.c.h.b16 %v261
    %v413 = vunpack.c.l.b16 %v262
    %v414 = vunpack.c.h.b16 %v262
    %v415 = vunpack.c.l.b16 %v263
    %v416 = vunpack.c.h.b16 %v263
    %v417 = vunpack.c.l.b16 %v264
    %v418 = vunpack.c.h.b16 %v264
    %v419 = vunpack.c.l.b16 %v265
    %v420 = vunpack.c.h.b16 %v265
    %v421 = vunpack.c.l.b16 %v266
    %v422 = vunpack.c.h.b16 %v266
    %v423 = vunpack.c.l.b16 %v267
    %v424 = vunpack.c.h.b16 %v267
    %v425 = vunpack.c.l.b16 %v268
    %v426 = vunpack.c.h.b16 %v268
    %v427 = vunpack.c.l.b16 %v269
    %v428 = vunpack.c.h.b16 %v269
    %v429 = vunpack.c.l.b16 %v270
    %v430 = vunpack.c.h.b16 %v270
    %v431 = vunpack.c.l.b16 %v271
    %v432 = vunpack.c.h.b16 %v271
    %v433 = vunpack.c.l.b16 %v272
    %v434 = vunpack.c.h.b16 %v272
    %v435 = vunpack.c.l.b16 %v273
    %v436 = vunpack.c.h.b16 %v273
    %v437 = vunpack.c.l.b16 %v274
    %v438 = vunpack.c.h.b16 %v274
    %v439 = vunpack.c.l.b16 %v275
    %v440 = vunpack.c.h.b16 %v275
    %v441 = vunpack.c.l.b16 %v276
    %v442 = vunpack.c.h.b16 %v276
    %v443 = vunpack.c.l.b16 %v277
    %v444 = vunpack.c.h.b16 %v277
    %v445 = vunpack.c.l.b16 %v278
    %v446 = vunpack.c.h.b16 %v278
    %v447 = vunpack.c.l.b16 %v279
    %v448 = vunpack.c.h.b16 %v279
    %v449 = vunpack.c.l.b16 %v280
    %v450 = vunpack.c.h.b16 %v280
    %v451 = vunpack.c.l.b16 %v281
    %v452 = vunpack.c.h.b16 %v281
    %v453 = vunpack.c.l.b16 %v282
    %v454 = vunpack.c.h.b16 %v282
    %v455 = vunpack.c.l.b16 %v283
    %v456 = vunpack.c.h.b16 %v283
    %v457 = vunpack.c.l.b16 %v284
    %v458 = vunpack.c.h.b16 %v284
    %v459 = vunpack.c.l.b16 %v285
    %v460 = vunpack.c.h.b16 %v285
    %v461 = vunpack.c.l.b16 %v286
    %v462 = vunpack.c.h.b16 %v286
    %v463 = vunpack.c.l.b16 %v287
    %v464 = vunpack.c.h.b16 %v287
    %v465 = vunpack.c.l.b16 %v288
    %v466 = vunpack.c.h.b16 %v288
    %v467 = vunpack.c.l.b16 %v289
    %v468 = vunpack.c.h.b16 %v289
    %v469 = vunpack.c.l.b16 %v290
    %v470 = vunpack.c.h.b16 %v290
    %v471 = vunpack.c.l.b16 %v291
    %v472 = vunpack.c.h.b16 %v291
    %v473 = vunpack.c.l.b16 %v292
    %v474 = vunpack.c.h.b16 %v292
    %v475 = vunpack.c.l.b16 %v293
    %v476 = vunpack.c.h.b16 %v293
    %v477 = vunpack.c.l.b16 %v294
    %v478 = vunpack.c.h.b16 %v294
    %v479 = vunpack.c.l.b16 %v295
    %v480 = vunpack.c.h.b16 %v295
    %v481 = vunpack.c.l.b16 %v296
    %v482 = vunpack.c.h.b16 %v296
    %v483 = vunpack.c.l.b16 %v297
    %v484 = vunpack.c.h.b16 %v297
    %v485 = vunpack.c.l.b16 %v298
    %v486 = vunpack.c.h.b16 %v298
    %v487 = vunpack.c.l.b16 %v299
    %v488 = vunpack.c.h.b16 %v299
    %v489 = vunpack.c.l.b16 %v300
    %v490 = vunpack.c.h.b16 %v300
    %v491 = vunpack.c.l.b16 %v301
    %v492 = vunpack.c.h.b16 %v301
    %v493 = vunpack.c.l.b16 %v302
    %v494 = vunpack.c.h.b16 %v302
    %v495 = vpack.c.b16 %v371, %v367
    %v496 = vpack.c.b16 %v372, %v368
    %v497 = vpack.c.b16 %v373, %v369
    %v498 = vpack.c.b16 %v374, %v370
    %v499 = vpack.c.b16 %v379, %v375
    %v500 = vpack.c.b16 %v380, %v376
    %v501 = vpack.c.b16 %v381, %v377
    %v502 = vpack.c.b16 %v382, %v378
    %v503 = vpack.c.b16 %v387, %v383
    %v504 = vpack.c.b16 %v388, %v384
    %v505 = vpack.c.b16 %v389, %v385
    %v506 = vpack.c.b16 %v390, %v386
    %v507 = vpack.c.b16 %v395, %v391
    %v508 = vpack.c.b16 %v396, %v392
    %v509 = vpack.c.b16 %v397, %v393
    %v510 = vpack.c.b16 %v398, %v394
    %v511 = vpack.c.b16 %v403, %v399
    %v512 = vpack.c.b16 %v404, %v400
    %v513 = vpack.c.b16 %v405, %v401
    %v514 = vpack.c.b16 %v406, %v402
    %v515 = vpack.c.b16 %v411, %v407
    %v516 = vpack.c.b16 %v412, %v408
    %v517 = vpack.c.b16 %v413, %v409
    %v518 = vpack.c.b16 %v414, %v410
    %v519 = vpack.c.b16 %v419, %v415
    %v520 = vpack.c.b16 %v420, %v416
    %v521 = vpack.c.b16 %v421, %v417
    %v522 = vpack.c.b16 %v422, %v418
    %v523 = vpack.c.b16 %v427, %v423
    %v524 = vpack.c.b16 %v428, %v424
    %v525 = vpack.c.b16 %v429, %v425
    %v526 = vpack.c.b16 %v430, %v426
    %v527 = vpack.c.b16 %v435, %v431
    %v528 = vpack.c.b16 %v436, %v432
    %v529 = vpack.c.b16 %v437, %v433
    %v530 = vpack.c.b16 %v438, %v434
    %v531 = vpack.c.b16 %v443, %v439
    %v532 = vpack.c.b16 %v444, %v440
    %v533 = vpack.c.b16 %v445, %v441
    %v534 = vpack.c.b16 %v446, %v442
    %v535 = vpack.c.b16 %v451, %v447
    %v536 = vpack.c.b16 %v452, %v448
    %v537 = vpack.c.b16 %v453, %v449
    %v538 = vpack.c.b16 %v454, %v450
    %v539 = vpack.c.b16 %v459, %v455
    %v540 = vpack.c.b16 %v460, %v456
    %v541 = vpack.c.b16 %v461, %v457
    %v542 = vpack.c.b16 %v462, %v458
    %v543 = vpack.c.b16 %v467, %v463
    %v544 = vpack.c.b16 %v468, %v464
    %v545 = vpack.c.b16 %v469, %v465
    %v546 = vpack.c.b16 %v470, %v466
    %v547 = vpack.c.b16 %v475, %v471
    %v548 = vpack.c.b16 %v476, %v472
    %v549 = vpack.c.b16 %v477, %v473
    %v550 = vpack.c.b16 %v478, %v474
    %v551 = vpack.c.b16 %v483, %v479
    %v552 = vpack.c.b16 %v484, %v480
    %v553 = vpack.c.b16 %v485, %v481
    %v554 = vpack.c.b16 %v486, %v482
    %v555 = vpack.c.b16 %v491, %v487
    %v556 = vpack.c.b16 %v492, %v488
    %v557 = vpack.c.b16 %v493, %v489
    %v558 = vpack.c.b16 %v494, %v490
    %623 = vmatpush.bf16.msra.mxu0 %v523
    %624 = vmatpush.bf16.msra.mxu0 %v519
    %625 = vmatpush.bf16.msra.mxu0 %v515
    %626 = vmatpush.bf16.msra.mxu0 %v511
    %627 = vmatpush.bf16.msra.mxu0 %v507
    %628 = vmatpush.bf16.msra.mxu0 %v503
    %629 = vmatpush.bf16.msra.mxu0 %v499
    %630 = vmatpush.bf16.msra.mxu0 %v495
    %631 = vmatmul.bf16.gmra.mxu0 %v237
    %v632 = vpop.f32.mrf.mxu0
    %v633 = vadd.f32 0.0, %v632
    %v634 = vpop.f32.mrf.mxu0
    %635 = vdwg.mxu0
    %636 = vmatpush.bf16.msra.mxu0 %v555
    %637 = vmatpush.bf16.msra.mxu0 %v551
    %638 = vmatpush.bf16.msra.mxu0 %v547
    %639 = vmatpush.bf16.msra.mxu0 %v543
    %640 = vmatpush.bf16.msra.mxu0 %v539
    %641 = vmatpush.bf16.msra.mxu0 %v535
    %642 = vmatpush.bf16.msra.mxu0 %v531
    %643 = vmatpush.bf16.msra.mxu0 %v527
    %644 = vmatmul.bf16.gmra.mxu0 %v238
    %v645 = vpop.f32.mrf.mxu0
    %v646 = vadd.f32 %v633, %v645
    %v647 = vpop.f32.mrf.mxu0
    %648 = vdwg.mxu0
    %649 = vmatpush.bf16.msra.mxu0 %v524
    %650 = vmatpush.bf16.msra.mxu0 %v520
    %651 = vmatpush.bf16.msra.mxu0 %v516
    %652 = vmatpush.bf16.msra.mxu0 %v512
    %653 = vmatpush.bf16.msra.mxu0 %v508
    %654 = vmatpush.bf16.msra.mxu0 %v504
    %655 = vmatpush.bf16.msra.mxu0 %v500
    %656 = vmatpush.bf16.msra.mxu0 %v496
    %657 = vmatmul.bf16.gmra.mxu0 %v237
    %v658 = vpop.f32.mrf.mxu0
    %v659 = vadd.f32 0.0, %v658
    %v660 = vpop.f32.mrf.mxu0
    %661 = vdwg.mxu0
    %662 = vmatpush.bf16.msra.mxu0 %v556
    %663 = vmatpush.bf16.msra.mxu0 %v552
    %664 = vmatpush.bf16.msra.mxu0 %v548
    %665 = vmatpush.bf16.msra.mxu0 %v544
    %666 = vmatpush.bf16.msra.mxu0 %v540
    %667 = vmatpush.bf16.msra.mxu0 %v536
    %668 = vmatpush.bf16.msra.mxu0 %v532
    %669 = vmatpush.bf16.msra.mxu0 %v528
    %670 = vmatmul.bf16.gmra.mxu0 %v238
    %v671 = vpop.f32.mrf.mxu0
    %v672 = vadd.f32 %v659, %v671
    %v673 = vpop.f32.mrf.mxu0
    %674 = vdwg.mxu0
    %675 = vmatpush.bf16.msra.mxu0 %v525
    %676 = vmatpush.bf16.msra.mxu0 %v521
    %677 = vmatpush.bf16.msra.mxu0 %v517
    %678 = vmatpush.bf16.msra.mxu0 %v513
    %679 = vmatpush.bf16.msra.mxu0 %v509
    %680 = vmatpush.bf16.msra.mxu0 %v505
    %681 = vmatpush.bf16.msra.mxu0 %v501
    %682 = vmatpush.bf16.msra.mxu0 %v497
    %683 = vmatmul.bf16.gmra.mxu0 %v237
    %v684 = vpop.f32.mrf.mxu0
    %v685 = vadd.f32 0.0, %v684
    %v686 = vpop.f32.mrf.mxu0
    %687 = vdwg.mxu0
    %688 = vmatpush.bf16.msra.mxu0 %v557
    %689 = vmatpush.bf16.msra.mxu0 %v553
    %690 = vmatpush.bf16.msra.mxu0 %v549
    %691 = vmatpush.bf16.msra.mxu0 %v545
    %692 = vmatpush.bf16.msra.mxu0 %v541
    %693 = vmatpush.bf16.msra.mxu0 %v537
    %694 = vmatpush.bf16.msra.mxu0 %v533
    %695 = vmatpush.bf16.msra.mxu0 %v529
    %696 = vmatmul.bf16.gmra.mxu0 %v238
    %v697 = vpop.f32.mrf.mxu0
    %v698 = vadd.f32 %v685, %v697
    %v699 = vpop.f32.mrf.mxu0
    %700 = vdwg.mxu0
    %701 = vmatpush.bf16.msra.mxu0 %v526
    %702 = vmatpush.bf16.msra.mxu0 %v522
    %703 = vmatpush.bf16.msra.mxu0 %v518
    %704 = vmatpush.bf16.msra.mxu0 %v514
    %705 = vmatpush.bf16.msra.mxu0 %v510
    %706 = vmatpush.bf16.msra.mxu0 %v506
    %707 = vmatpush.bf16.msra.mxu0 %v502
    %708 = vmatpush.bf16.msra.mxu0 %v498
    %709 = vmatmul.bf16.gmra.mxu0 %v237
    %v710 = vpop.f32.mrf.mxu0
    %v711 = vadd.f32 0.0, %v710
    %v712 = vpop.f32.mrf.mxu0
    %713 = vdwg.mxu0
    %714 = vmatpush.bf16.msra.mxu0 %v558
    %715 = vmatpush.bf16.msra.mxu0 %v554
    %716 = vmatpush.bf16.msra.mxu0 %v550
    %717 = vmatpush.bf16.msra.mxu0 %v546
    %718 = vmatpush.bf16.msra.mxu0 %v542
    %719 = vmatpush.bf16.msra.mxu0 %v538
    %720 = vmatpush.bf16.msra.mxu0 %v534
    %721 = vmatpush.bf16.msra.mxu0 %v530
    %722 = vmatmul.bf16.gmra.mxu0 %v238
    %v723 = vpop.f32.mrf.mxu0
    %v724 = vadd.f32 %v711, %v723
    %v725 = vpop.f32.mrf.mxu0
    %726 = vdwg.mxu0
    %v727 = vpack.c.bf16 %v672, %v646
    %v728 = vpack.c.bf16 %v724, %v698
    %v729 = vld [vmem:[#allocation9] sm:$0xf]
    %731 = vst [vmem:[#allocation1] ss:$9 sm:$0xff] %v729
    %v732 = vld [vmem:[#allocation1] sm:$0xff]
    %v733 = vld [vmem:[#allocation1 + $0x9] sm:$0xff]
    %v734 = vld [vmem:[#allocation1 + $0x12] sm:$0xff]
    %v735 = vld [vmem:[#allocation1 + $0x1b] sm:$0xff]
    %v736 = vpack.i.b16 %v732, %v732
    %v738 = vperm.slane %v736, 0
    %v739 = vpack.i.b16 %v733, %v733
    %v741 = vperm.slane %v739, 0
    %v742 = vpack.i.b16 %v734, %v734
    %v744 = vperm.slane %v742, 0
    %v745 = vpack.i.b16 %v735, %v735
    %v747 = vperm.slane %v745, 0
    %v748 = vunpack.c.l.bf16 %v727
    %v749 = vunpack.c.h.bf16 %v727
    %v750 = vunpack.c.l.bf16 %v728
    %v751 = vunpack.c.h.bf16 %v728
    %v752 = vunpack.c.l.bf16 %v738
    %v753 = vunpack.c.l.bf16 %v741
    %v754 = vunpack.c.l.bf16 %v744
    %v755 = vunpack.c.l.bf16 %v747
    %v756 = vadd.f32 %v748, %v752
    %v757 = vadd.f32 %v749, %v753
    %v758 = vadd.f32 %v750, %v754
    %v759 = vadd.f32 %v751, %v755
    %v760 = vpack.c.bf16 %v757, %v756
    %v761 = vpack.c.bf16 %v759, %v758
    %v762 = vunpack.c.l.bf16 %v760
    %v763 = vunpack.c.h.bf16 %v760
    %v764 = vunpack.c.l.bf16 %v761
    %v765 = vunpack.c.h.bf16 %v761
    %v766 = vmax.f32 %v762, 0.0
    %v767 = vmax.f32 %v763, 0.0
    %v768 = vmax.f32 %v764, 0.0
    %v769 = vmax.f32 %v765, 0.0
    %v770 = vpack.c.bf16 %v766, %v766
    %v771 = vpack.c.bf16 %v767, %v767
    %v772 = vpack.c.bf16 %v768, %v768
    %v773 = vpack.c.bf16 %v769, %v769
    %v774 = vld [vmem:[#allocation10] sm:$0xff]
    %v775 = vld [vmem:[#allocation10 + $0x8] sm:$0xff]
    %v776 = vld [vmem:[#allocation10 + $0x10] sm:$0xff]
    %v777 = vld [vmem:[#allocation10 + $0x18] sm:$0xff]
    %v778 = vld [vmem:[#allocation10 + $0x20] sm:$0xff]
    %v779 = vld [vmem:[#allocation10 + $0x28] sm:$0xff]
    %v780 = vld [vmem:[#allocation10 + $0x30] sm:$0xff]
    %v781 = vld [vmem:[#allocation10 + $0x38] sm:$0xff]
    %v782 = vld [vmem:[#allocation10 + $0x40] sm:$0xff]
    %v783 = vld [vmem:[#allocation10 + $0x48] sm:$0xff]
    %v784 = vld [vmem:[#allocation10 + $0x50] sm:$0xff]
    %v785 = vld [vmem:[#allocation10 + $0x58] sm:$0xff]
    %v786 = vld [vmem:[#allocation10 + $0x60] sm:$0xff]
    %v787 = vld [vmem:[#allocation10 + $0x68] sm:$0xff]
    %v788 = vld [vmem:[#allocation10 + $0x70] sm:$0xff]
    %v789 = vld [vmem:[#allocation10 + $0x78] sm:$0xff]
    %v790 = vld [vmem:[#allocation10 + $0x80] sm:$0xff]
    %v791 = vld [vmem:[#allocation10 + $0x88] sm:$0xff]
    %v792 = vld [vmem:[#allocation10 + $0x90] sm:$0xff]
    %v793 = vld [vmem:[#allocation10 + $0x98] sm:$0xff]
    %v794 = vld [vmem:[#allocation10 + $0xa0] sm:$0xff]
    %v795 = vld [vmem:[#allocation10 + $0xa8] sm:$0xff]
    %v796 = vld [vmem:[#allocation10 + $0xb0] sm:$0xff]
    %v797 = vld [vmem:[#allocation10 + $0xb8] sm:$0xff]
    %v798 = vld [vmem:[#allocation10 + $0xc0] sm:$0xff]
    %v799 = vld [vmem:[#allocation10 + $0xc8] sm:$0xff]
    %v800 = vld [vmem:[#allocation10 + $0xd0] sm:$0xff]
    %v801 = vld [vmem:[#allocation10 + $0xd8] sm:$0xff]
    %v802 = vld [vmem:[#allocation10 + $0xe0] sm:$0xff]
    %v803 = vld [vmem:[#allocation10 + $0xe8] sm:$0xff]
    %v804 = vld [vmem:[#allocation10 + $0xf0] sm:$0xff]
    %v805 = vld [vmem:[#allocation10 + $0xf8] sm:$0xff]
    %v806 = vld [vmem:[#allocation10 + $0x100] sm:$0xff]
    %v807 = vld [vmem:[#allocation10 + $0x108] sm:$0xff]
    %v808 = vld [vmem:[#allocation10 + $0x110] sm:$0xff]
    %v809 = vld [vmem:[#allocation10 + $0x118] sm:$0xff]
    %v810 = vld [vmem:[#allocation10 + $0x120] sm:$0xff]
    %v811 = vld [vmem:[#allocation10 + $0x128] sm:$0xff]
    %v812 = vld [vmem:[#allocation10 + $0x130] sm:$0xff]
    %v813 = vld [vmem:[#allocation10 + $0x138] sm:$0xff]
    %v814 = vld [vmem:[#allocation10 + $0x140] sm:$0xff]
    %v815 = vld [vmem:[#allocation10 + $0x148] sm:$0xff]
    %v816 = vld [vmem:[#allocation10 + $0x150] sm:$0xff]
    %v817 = vld [vmem:[#allocation10 + $0x158] sm:$0xff]
    %v818 = vld [vmem:[#allocation10 + $0x160] sm:$0xff]
    %v819 = vld [vmem:[#allocation10 + $0x168] sm:$0xff]
    %v820 = vld [vmem:[#allocation10 + $0x170] sm:$0xff]
    %v821 = vld [vmem:[#allocation10 + $0x178] sm:$0xff]
    %v822 = vld [vmem:[#allocation10 + $0x180] sm:$0xff]
    %v823 = vld [vmem:[#allocation10 + $0x188] sm:$0xff]
    %v824 = vld [vmem:[#allocation10 + $0x190] sm:$0xff]
    %v825 = vld [vmem:[#allocation10 + $0x198] sm:$0xff]
    %v826 = vld [vmem:[#allocation10 + $0x1a0] sm:$0xff]
    %v827 = vld [vmem:[#allocation10 + $0x1a8] sm:$0xff]
    %v828 = vld [vmem:[#allocation10 + $0x1b0] sm:$0xff]
    %v829 = vld [vmem:[#allocation10 + $0x1b8] sm:$0xff]
    %v830 = vld [vmem:[#allocation10 + $0x1c0] sm:$0xff]
    %v831 = vld [vmem:[#allocation10 + $0x1c8] sm:$0xff]
    %v832 = vld [vmem:[#allocation10 + $0x1d0] sm:$0xff]
    %v833 = vld [vmem:[#allocation10 + $0x1d8] sm:$0xff]
    %v834 = vld [vmem:[#allocation10 + $0x1e0] sm:$0xff]
    %v835 = vld [vmem:[#allocation10 + $0x1e8] sm:$0xff]
    %v836 = vld [vmem:[#allocation10 + $0x1f0] sm:$0xff]
    %v837 = vld [vmem:[#allocation10 + $0x1f8] sm:$0xff]
    %v902 = vunpack.c.l.b16 %v774
    %v903 = vunpack.c.h.b16 %v774
    %v904 = vunpack.c.l.b16 %v775
    %v905 = vunpack.c.h.b16 %v775
    %v906 = vunpack.c.l.b16 %v776
    %v907 = vunpack.c.h.b16 %v776
    %v908 = vunpack.c.l.b16 %v777
    %v909 = vunpack.c.h.b16 %v777
    %v910 = vunpack.c.l.b16 %v778
    %v911 = vunpack.c.h.b16 %v778
    %v912 = vunpack.c.l.b16 %v779
    %v913 = vunpack.c.h.b16 %v779
    %v914 = vunpack.c.l.b16 %v780
    %v915 = vunpack.c.h.b16 %v780
    %v916 = vunpack.c.l.b16 %v781
    %v917 = vunpack.c.h.b16 %v781
    %v918 = vunpack.c.l.b16 %v782
    %v919 = vunpack.c.h.b16 %v782
    %v920 = vunpack.c.l.b16 %v783
    %v921 = vunpack.c.h.b16 %v783
    %v922 = vunpack.c.l.b16 %v784
    %v923 = vunpack.c.h.b16 %v784
    %v924 = vunpack.c.l.b16 %v785
    %v925 = vunpack.c.h.b16 %v785
    %v926 = vunpack.c.l.b16 %v786
    %v927 = vunpack.c.h.b16 %v786
    %v928 = vunpack.c.l.b16 %v787
    %v929 = vunpack.c.h.b16 %v787
    %v930 = vunpack.c.l.b16 %v788
    %v931 = vunpack.c.h.b16 %v788
    %v932 = vunpack.c.l.b16 %v789
    %v933 = vunpack.c.h.b16 %v789
    %v934 = vunpack.c.l.b16 %v790
    %v935 = vunpack.c.h.b16 %v790
    %v936 = vunpack.c.l.b16 %v791
    %v937 = vunpack.c.h.b16 %v791
    %v938 = vunpack.c.l.b16 %v792
    %v939 = vunpack.c.h.b16 %v792
    %v940 = vunpack.c.l.b16 %v793
    %v941 = vunpack.c.h.b16 %v793
    %v942 = vunpack.c.l.b16 %v794
    %v943 = vunpack.c.h.b16 %v794
    %v944 = vunpack.c.l.b16 %v795
    %v945 = vunpack.c.h.b16 %v795
    %v946 = vunpack.c.l.b16 %v796
    %v947 = vunpack.c.h.b16 %v796
    %v948 = vunpack.c.l.b16 %v797
    %v949 = vunpack.c.h.b16 %v797
    %v950 = vunpack.c.l.b16 %v798
    %v951 = vunpack.c.h.b16 %v798
    %v952 = vunpack.c.l.b16 %v799
    %v953 = vunpack.c.h.b16 %v799
    %v954 = vunpack.c.l.b16 %v800
    %v955 = vunpack.c.h.b16 %v800
    %v956 = vunpack.c.l.b16 %v801
    %v957 = vunpack.c.h.b16 %v801
    %v958 = vunpack.c.l.b16 %v802
    %v959 = vunpack.c.h.b16 %v802
    %v960 = vunpack.c.l.b16 %v803
    %v961 = vunpack.c.h.b16 %v803
    %v962 = vunpack.c.l.b16 %v804
    %v963 = vunpack.c.h.b16 %v804
    %v964 = vunpack.c.l.b16 %v805
    %v965 = vunpack.c.h.b16 %v805
    %v966 = vunpack.c.l.b16 %v806
    %v967 = vunpack.c.h.b16 %v806
    %v968 = vunpack.c.l.b16 %v807
    %v969 = vunpack.c.h.b16 %v807
    %v970 = vunpack.c.l.b16 %v808
    %v971 = vunpack.c.h.b16 %v808
    %v972 = vunpack.c.l.b16 %v809
    %v973 = vunpack.c.h.b16 %v809
    %v974 = vunpack.c.l.b16 %v810
    %v975 = vunpack.c.h.b16 %v810
    %v976 = vunpack.c.l.b16 %v811
    %v977 = vunpack.c.h.b16 %v811
    %v978 = vunpack.c.l.b16 %v812
    %v979 = vunpack.c.h.b16 %v812
    %v980 = vunpack.c.l.b16 %v813
    %v981 = vunpack.c.h.b16 %v813
    %v982 = vunpack.c.l.b16 %v814
    %v983 = vunpack.c.h.b16 %v814
    %v984 = vunpack.c.l.b16 %v815
    %v985 = vunpack.c.h.b16 %v815
    %v986 = vunpack.c.l.b16 %v816
    %v987 = vunpack.c.h.b16 %v816
    %v988 = vunpack.c.l.b16 %v817
    %v989 = vunpack.c.h.b16 %v817
    %v990 = vunpack.c.l.b16 %v818
    %v991 = vunpack.c.h.b16 %v818
    %v992 = vunpack.c.l.b16 %v819
    %v993 = vunpack.c.h.b16 %v819
    %v994 = vunpack.c.l.b16 %v820
    %v995 = vunpack.c.h.b16 %v820
    %v996 = vunpack.c.l.b16 %v821
    %v997 = vunpack.c.h.b16 %v821
    %v998 = vunpack.c.l.b16 %v822
    %v999 = vunpack.c.h.b16 %v822
    %v1000 = vunpack.c.l.b16 %v823
    %v1001 = vunpack.c.h.b16 %v823
    %v1002 = vunpack.c.l.b16 %v824
    %v1003 = vunpack.c.h.b16 %v824
    %v1004 = vunpack.c.l.b16 %v825
    %v1005 = vunpack.c.h.b16 %v825
    %v1006 = vunpack.c.l.b16 %v826
    %v1007 = vunpack.c.h.b16 %v826
    %v1008 = vunpack.c.l.b16 %v827
    %v1009 = vunpack.c.h.b16 %v827
    %v1010 = vunpack.c.l.b16 %v828
    %v1011 = vunpack.c.h.b16 %v828
    %v1012 = vunpack.c.l.b16 %v829
    %v1013 = vunpack.c.h.b16 %v829
    %v1014 = vunpack.c.l.b16 %v830
    %v1015 = vunpack.c.h.b16 %v830
    %v1016 = vunpack.c.l.b16 %v831
    %v1017 = vunpack.c.h.b16 %v831
    %v1018 = vunpack.c.l.b16 %v832
    %v1019 = vunpack.c.h.b16 %v832
    %v1020 = vunpack.c.l.b16 %v833
    %v1021 = vunpack.c.h.b16 %v833
    %v1022 = vunpack.c.l.b16 %v834
    %v1023 = vunpack.c.h.b16 %v834
    %v1024 = vunpack.c.l.b16 %v835
    %v1025 = vunpack.c.h.b16 %v835
    %v1026 = vunpack.c.l.b16 %v836
    %v1027 = vunpack.c.h.b16 %v836
    %v1028 = vunpack.c.l.b16 %v837
    %v1029 = vunpack.c.h.b16 %v837
    %v1030 = vpack.c.b16 %v904, %v902
    %v1031 = vpack.c.b16 %v905, %v903
    %v1032 = vpack.c.b16 %v908, %v906
    %v1033 = vpack.c.b16 %v909, %v907
    %v1034 = vpack.c.b16 %v912, %v910
    %v1035 = vpack.c.b16 %v913, %v911
    %v1036 = vpack.c.b16 %v916, %v914
    %v1037 = vpack.c.b16 %v917, %v915
    %v1038 = vpack.c.b16 %v920, %v918
    %v1039 = vpack.c.b16 %v921, %v919
    %v1040 = vpack.c.b16 %v924, %v922
    %v1041 = vpack.c.b16 %v925, %v923
    %v1042 = vpack.c.b16 %v928, %v926
    %v1043 = vpack.c.b16 %v929, %v927
    %v1044 = vpack.c.b16 %v932, %v930
    %v1045 = vpack.c.b16 %v933, %v931
    %v1046 = vpack.c.b16 %v936, %v934
    %v1047 = vpack.c.b16 %v937, %v935
    %v1048 = vpack.c.b16 %v940, %v938
    %v1049 = vpack.c.b16 %v941, %v939
    %v1050 = vpack.c.b16 %v944, %v942
    %v1051 = vpack.c.b16 %v945, %v943
    %v1052 = vpack.c.b16 %v948, %v946
    %v1053 = vpack.c.b16 %v949, %v947
    %v1054 = vpack.c.b16 %v952, %v950
    %v1055 = vpack.c.b16 %v953, %v951
    %v1056 = vpack.c.b16 %v956, %v954
    %v1057 = vpack.c.b16 %v957, %v955
    %v1058 = vpack.c.b16 %v960, %v958
    %v1059 = vpack.c.b16 %v961, %v959
    %v1060 = vpack.c.b16 %v964, %v962
    %v1061 = vpack.c.b16 %v965, %v963
    %v1062 = vpack.c.b16 %v968, %v966
    %v1063 = vpack.c.b16 %v969, %v967
    %v1064 = vpack.c.b16 %v972, %v970
    %v1065 = vpack.c.b16 %v973, %v971
    %v1066 = vpack.c.b16 %v976, %v974
    %v1067 = vpack.c.b16 %v977, %v975
    %v1068 = vpack.c.b16 %v980, %v978
    %v1069 = vpack.c.b16 %v981, %v979
    %v1070 = vpack.c.b16 %v984, %v982
    %v1071 = vpack.c.b16 %v985, %v983
    %v1072 = vpack.c.b16 %v988, %v986
    %v1073 = vpack.c.b16 %v989, %v987
    %v1074 = vpack.c.b16 %v992, %v990
    %v1075 = vpack.c.b16 %v993, %v991
    %v1076 = vpack.c.b16 %v996, %v994
    %v1077 = vpack.c.b16 %v997, %v995
    %v1078 = vpack.c.b16 %v1000, %v998
    %v1079 = vpack.c.b16 %v1001, %v999
    %v1080 = vpack.c.b16 %v1004, %v1002
    %v1081 = vpack.c.b16 %v1005, %v1003
    %v1082 = vpack.c.b16 %v1008, %v1006
    %v1083 = vpack.c.b16 %v1009, %v1007
    %v1084 = vpack.c.b16 %v1012, %v1010
    %v1085 = vpack.c.b16 %v1013, %v1011
    %v1086 = vpack.c.b16 %v1016, %v1014
    %v1087 = vpack.c.b16 %v1017, %v1015
    %v1088 = vpack.c.b16 %v1020, %v1018
    %v1089 = vpack.c.b16 %v1021, %v1019
    %v1090 = vpack.c.b16 %v1024, %v1022
    %v1091 = vpack.c.b16 %v1025, %v1023
    %v1092 = vpack.c.b16 %v1028, %v1026
    %v1093 = vpack.c.b16 %v1029, %v1027
    %1158 = vmatpush.bf16.msra.mxu0 %v1044
    %1159 = vmatpush.bf16.msra.mxu0 %v1042
    %1160 = vmatpush.bf16.msra.mxu0 %v1040
    %1161 = vmatpush.bf16.msra.mxu0 %v1038
    %1162 = vmatpush.bf16.msra.mxu0 %v1036
    %1163 = vmatpush.bf16.msra.mxu0 %v1034
    %1164 = vmatpush.bf16.msra.mxu0 %v1032
    %1165 = vmatpush.bf16.msra.mxu0 %v1030
    %1166 = vmatmul.bf16.gmra.mxu0 %v770
    %v1167 = vpop.f32.mrf.mxu0
    %v1168 = vadd.f32 0.0, %v1167
    %v1169 = vpop.f32.mrf.mxu0
    %1170 = vdwg.mxu0
    %1171 = vmatpush.bf16.msra.mxu0 %v1060
    %1172 = vmatpush.bf16.msra.mxu0 %v1058
    %1173 = vmatpush.bf16.msra.mxu0 %v1056
    %1174 = vmatpush.bf16.msra.mxu0 %v1054
    %1175 = vmatpush.bf16.msra.mxu0 %v1052
    %1176 = vmatpush.bf16.msra.mxu0 %v1050
    %1177 = vmatpush.bf16.msra.mxu0 %v1048
    %1178 = vmatpush.bf16.msra.mxu0 %v1046
    %1179 = vmatmul.bf16.gmra.mxu0 %v771
    %v1180 = vpop.f32.mrf.mxu0
    %v1181 = vadd.f32 %v1168, %v1180
    %v1182 = vpop.f32.mrf.mxu0
    %1183 = vdwg.mxu0
    %1184 = vmatpush.bf16.msra.mxu0 %v1076
    %1185 = vmatpush.bf16.msra.mxu0 %v1074
    %1186 = vmatpush.bf16.msra.mxu0 %v1072
    %1187 = vmatpush.bf16.msra.mxu0 %v1070
    %1188 = vmatpush.bf16.msra.mxu0 %v1068
    %1189 = vmatpush.bf16.msra.mxu0 %v1066
    %1190 = vmatpush.bf16.msra.mxu0 %v1064
    %1191 = vmatpush.bf16.msra.mxu0 %v1062
    %1192 = vmatmul.bf16.gmra.mxu0 %v772
    %v1193 = vpop.f32.mrf.mxu0
    %v1194 = vadd.f32 %v1181, %v1193
    %v1195 = vpop.f32.mrf.mxu0
    %1196 = vdwg.mxu0
    %1197 = vmatpush.bf16.msra.mxu0 %v1092
    %1198 = vmatpush.bf16.msra.mxu0 %v1090
    %1199 = vmatpush.bf16.msra.mxu0 %v1088
    %1200 = vmatpush.bf16.msra.mxu0 %v1086
    %1201 = vmatpush.bf16.msra.mxu0 %v1084
    %1202 = vmatpush.bf16.msra.mxu0 %v1082
    %1203 = vmatpush.bf16.msra.mxu0 %v1080
    %1204 = vmatpush.bf16.msra.mxu0 %v1078
    %1205 = vmatmul.bf16.gmra.mxu0 %v773
    %v1206 = vpop.f32.mrf.mxu0
    %v1207 = vadd.f32 %v1194, %v1206
    %v1208 = vpop.f32.mrf.mxu0
    %1209 = vdwg.mxu0
    %1210 = vmatpush.bf16.msra.mxu0 %v1045
    %1211 = vmatpush.bf16.msra.mxu0 %v1043
    %1212 = vmatpush.bf16.msra.mxu0 %v1041
    %1213 = vmatpush.bf16.msra.mxu0 %v1039
    %1214 = vmatpush.bf16.msra.mxu0 %v1037
    %1215 = vmatpush.bf16.msra.mxu0 %v1035
    %1216 = vmatpush.bf16.msra.mxu0 %v1033
    %1217 = vmatpush.bf16.msra.mxu0 %v1031
    %1218 = vmatmul.bf16.gmra.mxu0 %v770
    %v1219 = vpop.f32.mrf.mxu0
    %v1220 = vadd.f32 0.0, %v1219
    %v1221 = vpop.f32.mrf.mxu0
    %1222 = vdwg.mxu0
    %1223 = vmatpush.bf16.msra.mxu0 %v1061
    %1224 = vmatpush.bf16.msra.mxu0 %v1059
    %1225 = vmatpush.bf16.msra.mxu0 %v1057
    %1226 = vmatpush.bf16.msra.mxu0 %v1055
    %1227 = vmatpush.bf16.msra.mxu0 %v1053
    %1228 = vmatpush.bf16.msra.mxu0 %v1051
    %1229 = vmatpush.bf16.msra.mxu0 %v1049
    %1230 = vmatpush.bf16.msra.mxu0 %v1047
    %1231 = vmatmul.bf16.gmra.mxu0 %v771
    %v1232 = vpop.f32.mrf.mxu0
    %v1233 = vadd.f32 %v1220, %v1232
    %v1234 = vpop.f32.mrf.mxu0
    %1235 = vdwg.mxu0
    %1236 = vmatpush.bf16.msra.mxu0 %v1077
    %1237 = vmatpush.bf16.msra.mxu0 %v1075
    %1238 = vmatpush.bf16.msra.mxu0 %v1073
    %1239 = vmatpush.bf16.msra.mxu0 %v1071
    %1240 = vmatpush.bf16.msra.mxu0 %v1069
    %1241 = vmatpush.bf16.msra.mxu0 %v1067
    %1242 = vmatpush.bf16.msra.mxu0 %v1065
    %1243 = vmatpush.bf16.msra.mxu0 %v1063
    %1244 = vmatmul.bf16.gmra.mxu0 %v772
    %v1245 = vpop.f32.mrf.mxu0
    %v1246 = vadd.f32 %v1233, %v1245
    %v1247 = vpop.f32.mrf.mxu0
    %1248 = vdwg.mxu0
    %1249 = vmatpush.bf16.msra.mxu0 %v1093
    %1250 = vmatpush.bf16.msra.mxu0 %v1091
    %1251 = vmatpush.bf16.msra.mxu0 %v1089
    %1252 = vmatpush.bf16.msra.mxu0 %v1087
    %1253 = vmatpush.bf16.msra.mxu0 %v1085
    %1254 = vmatpush.bf16.msra.mxu0 %v1083
    %1255 = vmatpush.bf16.msra.mxu0 %v1081
    %1256 = vmatpush.bf16.msra.mxu0 %v1079
    %1257 = vmatmul.bf16.gmra.mxu0 %v773
    %v1258 = vpop.f32.mrf.mxu0
    %v1259 = vadd.f32 %v1246, %v1258
    %v1260 = vpop.f32.mrf.mxu0
    %1261 = vdwg.mxu0
    %v1262 = vpack.c.bf16 %v1259, %v1207
    %v1263 = vld [vmem:[%s6] sm:$0x3]
    %1265 = vst [vmem:[#allocation1] ss:$9 sm:$0xff] %v1263
    %v1266 = vld [vmem:[#allocation1] sm:$0xff]
    %v1267 = vld [vmem:[#allocation1 + $0x9] sm:$0xff]
    %v1268 = vpack.i.b16 %v1266, %v1266
    %v1270 = vperm.slane %v1268, 0
    %v1271 = vpack.i.b16 %v1267, %v1267
    %v1273 = vperm.slane %v1271, 0
    %v1274 = vunpack.c.l.bf16 %v1262
    %v1275 = vunpack.c.h.bf16 %v1262
    %v1276 = vunpack.c.l.bf16 %v1270
    %v1277 = vunpack.c.l.bf16 %v1273
    %v1278 = vadd.f32 %v1274, %v1276
    %v1279 = vadd.f32 %v1275, %v1277
    %v1280 = vpack.c.bf16 %v1279, %v1278
    %v1281 = vunpack.c.l.bf16 %v1280
    %v1282 = vunpack.c.h.bf16 %v1280
    %v1283 = vmax.f32 %v1281, 0.0
    %v1284 = vmax.f32 %v1282, 0.0
    %v1285 = vpack.c.bf16 %v1283, %v1283
    %v1286 = vpack.c.bf16 %v1284, %v1284
    %v1287 = vld [vmem:[#allocation12] sm:$0xff]
    %v1288 = vld [vmem:[#allocation12 + $0x8] sm:$0xff]
    %v1289 = vld [vmem:[#allocation12 + $0x10] sm:$0xff]
    %v1290 = vld [vmem:[#allocation12 + $0x18] sm:$0xff]
    %v1291 = vld [vmem:[#allocation12 + $0x20] sm:$0xff]
    %v1292 = vld [vmem:[#allocation12 + $0x28] sm:$0xff]
    %v1293 = vld [vmem:[#allocation12 + $0x30] sm:$0xff]
    %v1294 = vld [vmem:[#allocation12 + $0x38] sm:$0xff]
    %v1295 = vld [vmem:[#allocation12 + $0x40] sm:$0xff]
    %v1296 = vld [vmem:[#allocation12 + $0x48] sm:$0xff]
    %v1297 = vld [vmem:[#allocation12 + $0x50] sm:$0xff]
    %v1298 = vld [vmem:[#allocation12 + $0x58] sm:$0xff]
    %v1299 = vld [vmem:[#allocation12 + $0x60] sm:$0xff]
    %v1300 = vld [vmem:[#allocation12 + $0x68] sm:$0xff]
    %v1301 = vld [vmem:[#allocation12 + $0x70] sm:$0xff]
    %v1302 = vld [vmem:[#allocation12 + $0x78] sm:$0xff]
    %v1303 = vld [vmem:[#allocation12 + $0x80] sm:$0xff]
    %v1304 = vld [vmem:[#allocation12 + $0x88] sm:$0xff]
    %v1305 = vld [vmem:[#allocation12 + $0x90] sm:$0xff]
    %v1306 = vld [vmem:[#allocation12 + $0x98] sm:$0xff]
    %v1307 = vld [vmem:[#allocation12 + $0xa0] sm:$0xff]
    %v1308 = vld [vmem:[#allocation12 + $0xa8] sm:$0xff]
    %v1309 = vld [vmem:[#allocation12 + $0xb0] sm:$0xff]
    %v1310 = vld [vmem:[#allocation12 + $0xb8] sm:$0xff]
    %v1311 = vld [vmem:[#allocation12 + $0xc0] sm:$0xff]
    %v1312 = vld [vmem:[#allocation12 + $0xc8] sm:$0xff]
    %v1313 = vld [vmem:[#allocation12 + $0xd0] sm:$0xff]
    %v1314 = vld [vmem:[#allocation12 + $0xd8] sm:$0xff]
    %v1315 = vld [vmem:[#allocation12 + $0xe0] sm:$0xff]
    %v1316 = vld [vmem:[#allocation12 + $0xe8] sm:$0xff]
    %v1317 = vld [vmem:[#allocation12 + $0xf0] sm:$0xff]
    %v1318 = vld [vmem:[#allocation12 + $0xf8] sm:$0xff]
    %v1351 = vunpack.c.l.b16 %v1287
    %v1352 = vunpack.c.h.b16 %v1287
    %v1353 = vunpack.c.l.b16 %v1288
    %v1354 = vunpack.c.h.b16 %v1288
    %v1355 = vunpack.c.l.b16 %v1289
    %v1356 = vunpack.c.h.b16 %v1289
    %v1357 = vunpack.c.l.b16 %v1290
    %v1358 = vunpack.c.h.b16 %v1290
    %v1359 = vunpack.c.l.b16 %v1291
    %v1360 = vunpack.c.h.b16 %v1291
    %v1361 = vunpack.c.l.b16 %v1292
    %v1362 = vunpack.c.h.b16 %v1292
    %v1363 = vunpack.c.l.b16 %v1293
    %v1364 = vunpack.c.h.b16 %v1293
    %v1365 = vunpack.c.l.b16 %v1294
    %v1366 = vunpack.c.h.b16 %v1294
    %v1367 = vunpack.c.l.b16 %v1295
    %v1368 = vunpack.c.h.b16 %v1295
    %v1369 = vunpack.c.l.b16 %v1296
    %v1370 = vunpack.c.h.b16 %v1296
    %v1371 = vunpack.c.l.b16 %v1297
    %v1372 = vunpack.c.h.b16 %v1297
    %v1373 = vunpack.c.l.b16 %v1298
    %v1374 = vunpack.c.h.b16 %v1298
    %v1375 = vunpack.c.l.b16 %v1299
    %v1376 = vunpack.c.h.b16 %v1299
    %v1377 = vunpack.c.l.b16 %v1300
    %v1378 = vunpack.c.h.b16 %v1300
    %v1379 = vunpack.c.l.b16 %v1301
    %v1380 = vunpack.c.h.b16 %v1301
    %v1381 = vunpack.c.l.b16 %v1302
    %v1382 = vunpack.c.h.b16 %v1302
    %v1383 = vunpack.c.l.b16 %v1303
    %v1384 = vunpack.c.h.b16 %v1303
    %v1385 = vunpack.c.l.b16 %v1304
    %v1386 = vunpack.c.h.b16 %v1304
    %v1387 = vunpack.c.l.b16 %v1305
    %v1388 = vunpack.c.h.b16 %v1305
    %v1389 = vunpack.c.l.b16 %v1306
    %v1390 = vunpack.c.h.b16 %v1306
    %v1391 = vunpack.c.l.b16 %v1307
    %v1392 = vunpack.c.h.b16 %v1307
    %v1393 = vunpack.c.l.b16 %v1308
    %v1394 = vunpack.c.h.b16 %v1308
    %v1395 = vunpack.c.l.b16 %v1309
    %v1396 = vunpack.c.h.b16 %v1309
    %v1397 = vunpack.c.l.b16 %v1310
    %v1398 = vunpack.c.h.b16 %v1310
    %v1399 = vunpack.c.l.b16 %v1311
    %v1400 = vunpack.c.h.b16 %v1311
    %v1401 = vunpack.c.l.b16 %v1312
    %v1402 = vunpack.c.h.b16 %v1312
    %v1403 = vunpack.c.l.b16 %v1313
    %v1404 = vunpack.c.h.b16 %v1313
    %v1405 = vunpack.c.l.b16 %v1314
    %v1406 = vunpack.c.h.b16 %v1314
    %v1407 = vunpack.c.l.b16 %v1315
    %v1408 = vunpack.c.h.b16 %v1315
    %v1409 = vunpack.c.l.b16 %v1316
    %v1410 = vunpack.c.h.b16 %v1316
    %v1411 = vunpack.c.l.b16 %v1317
    %v1412 = vunpack.c.h.b16 %v1317
    %v1413 = vunpack.c.l.b16 %v1318
    %v1414 = vunpack.c.h.b16 %v1318
    %v1415 = vpack.c.b16 %v1353, %v1351
    %v1416 = vpack.c.b16 %v1354, %v1352
    %v1417 = vpack.c.b16 %v1357, %v1355
    %v1418 = vpack.c.b16 %v1358, %v1356
    %v1419 = vpack.c.b16 %v1361, %v1359
    %v1420 = vpack.c.b16 %v1362, %v1360
    %v1421 = vpack.c.b16 %v1365, %v1363
    %v1422 = vpack.c.b16 %v1366, %v1364
    %v1423 = vpack.c.b16 %v1369, %v1367
    %v1424 = vpack.c.b16 %v1370, %v1368
    %v1425 = vpack.c.b16 %v1373, %v1371
    %v1426 = vpack.c.b16 %v1374, %v1372
    %v1427 = vpack.c.b16 %v1377, %v1375
    %v1428 = vpack.c.b16 %v1378, %v1376
    %v1429 = vpack.c.b16 %v1381, %v1379
    %v1430 = vpack.c.b16 %v1382, %v1380
    %v1431 = vpack.c.b16 %v1385, %v1383
    %v1432 = vpack.c.b16 %v1386, %v1384
    %v1433 = vpack.c.b16 %v1389, %v1387
    %v1434 = vpack.c.b16 %v1390, %v1388
    %v1435 = vpack.c.b16 %v1393, %v1391
    %v1436 = vpack.c.b16 %v1394, %v1392
    %v1437 = vpack.c.b16 %v1397, %v1395
    %v1438 = vpack.c.b16 %v1398, %v1396
    %v1439 = vpack.c.b16 %v1401, %v1399
    %v1440 = vpack.c.b16 %v1402, %v1400
    %v1441 = vpack.c.b16 %v1405, %v1403
    %v1442 = vpack.c.b16 %v1406, %v1404
    %v1443 = vpack.c.b16 %v1409, %v1407
    %v1444 = vpack.c.b16 %v1410, %v1408
    %v1445 = vpack.c.b16 %v1413, %v1411
    %v1446 = vpack.c.b16 %v1414, %v1412
    %1479 = vmatpush.bf16.msra.mxu0 %v1429
    %1480 = vmatpush.bf16.msra.mxu0 %v1427
    %1481 = vmatpush.bf16.msra.mxu0 %v1425
    %1482 = vmatpush.bf16.msra.mxu0 %v1423
    %1483 = vmatpush.bf16.msra.mxu0 %v1421
    %1484 = vmatpush.bf16.msra.mxu0 %v1419
    %1485 = vmatpush.bf16.msra.mxu0 %v1417
    %1486 = vmatpush.bf16.msra.mxu0 %v1415
    %1487 = vmatmul.bf16.gmra.mxu0 %v1285
    %v1488 = vpop.f32.mrf.mxu0
    %v1489 = vadd.f32 0.0, %v1488
    %v1490 = vpop.f32.mrf.mxu0
    %1491 = vdwg.mxu0
    %1492 = vmatpush.bf16.msra.mxu0 %v1445
    %1493 = vmatpush.bf16.msra.mxu0 %v1443
    %1494 = vmatpush.bf16.msra.mxu0 %v1441
    %1495 = vmatpush.bf16.msra.mxu0 %v1439
    %1496 = vmatpush.bf16.msra.mxu0 %v1437
    %1497 = vmatpush.bf16.msra.mxu0 %v1435
    %1498 = vmatpush.bf16.msra.mxu0 %v1433
    %1499 = vmatpush.bf16.msra.mxu0 %v1431
    %1500 = vmatmul.bf16.gmra.mxu0 %v1286
    %v1501 = vpop.f32.mrf.mxu0
    %v1502 = vadd.f32 %v1489, %v1501
    %v1503 = vpop.f32.mrf.mxu0
    %1504 = vdwg.mxu0
    %1505 = vmatpush.bf16.msra.mxu0 %v1430
    %1506 = vmatpush.bf16.msra.mxu0 %v1428
    %1507 = vmatpush.bf16.msra.mxu0 %v1426
    %1508 = vmatpush.bf16.msra.mxu0 %v1424
    %1509 = vmatpush.bf16.msra.mxu0 %v1422
    %1510 = vmatpush.bf16.msra.mxu0 %v1420
    %1511 = vmatpush.bf16.msra.mxu0 %v1418
    %1512 = vmatpush.bf16.msra.mxu0 %v1416
    %1513 = vmatmul.bf16.gmra.mxu0 %v1285
    %v1514 = vpop.f32.mrf.mxu0
    %v1515 = vadd.f32 0.0, %v1514
    %v1516 = vpop.f32.mrf.mxu0
    %1517 = vdwg.mxu0
    %1518 = vmatpush.bf16.msra.mxu0 %v1446
    %1519 = vmatpush.bf16.msra.mxu0 %v1444
    %1520 = vmatpush.bf16.msra.mxu0 %v1442
    %1521 = vmatpush.bf16.msra.mxu0 %v1440
    %1522 = vmatpush.bf16.msra.mxu0 %v1438
    %1523 = vmatpush.bf16.msra.mxu0 %v1436
    %1524 = vmatpush.bf16.msra.mxu0 %v1434
    %1525 = vmatpush.bf16.msra.mxu0 %v1432
    %1526 = vmatmul.bf16.gmra.mxu0 %v1286
    %v1527 = vpop.f32.mrf.mxu0
    %v1528 = vadd.f32 %v1515, %v1527
    %v1529 = vpop.f32.mrf.mxu0
    %1530 = vdwg.mxu0
    %v1531 = vpack.c.bf16 %v1528, %v1502
    %v1532 = vld [vmem:[%s8] sm:$0x3]
    %1534 = vst [vmem:[#allocation1] ss:$9 sm:$0xff] %v1532
    %v1535 = vld [vmem:[#allocation1] sm:$0xff]
    %v1536 = vld [vmem:[#allocation1 + $0x9] sm:$0xff]
    %v1537 = vpack.i.b16 %v1535, %v1535
    %v1539 = vperm.slane %v1537, 0
    %v1540 = vpack.i.b16 %v1536, %v1536
    %v1542 = vperm.slane %v1540, 0
    %v1543 = vunpack.c.l.bf16 %v1531
    %v1544 = vunpack.c.h.bf16 %v1531
    %v1545 = vunpack.c.l.bf16 %v1539
    %v1546 = vunpack.c.l.bf16 %v1542
    %v1547 = vadd.f32 %v1543, %v1545
    %v1548 = vadd.f32 %v1544, %v1546
    %v1549 = vpack.c.bf16 %v1548, %v1547
    %v1550 = vunpack.c.l.bf16 %v1549
    %v1551 = vunpack.c.h.bf16 %v1549
    %v1552 = vmax.f32 %v1550, 0.0
    %v1553 = vmax.f32 %v1551, 0.0
    %v1554 = vpack.c.bf16 %v1552, %v1552
    %v1555 = vpack.c.bf16 %v1553, %v1553
    %v1556 = vld [vmem:[#allocation13] sm:$0xf]
    %v1557 = vld [vmem:[#allocation13 + $0x4] sm:$0xf]
    %v1558 = vld [vmem:[#allocation13 + $0x8] sm:$0xf]
    %v1559 = vld [vmem:[#allocation13 + $0xc] sm:$0xf]
    %v1560 = vld [vmem:[#allocation13 + $0x10] sm:$0xf]
    %v1561 = vld [vmem:[#allocation13 + $0x14] sm:$0xf]
    %v1562 = vld [vmem:[#allocation13 + $0x18] sm:$0xf]
    %v1563 = vld [vmem:[#allocation13 + $0x1c] sm:$0xf]
    %v1564 = vld [vmem:[#allocation13 + $0x20] sm:$0xf]
    %v1565 = vld [vmem:[#allocation13 + $0x24] sm:$0xf]
    %v1566 = vld [vmem:[#allocation13 + $0x28] sm:$0xf]
    %v1567 = vld [vmem:[#allocation13 + $0x2c] sm:$0xf]
    %v1568 = vld [vmem:[#allocation13 + $0x30] sm:$0xf]
    %v1569 = vld [vmem:[#allocation13 + $0x34] sm:$0xf]
    %v1570 = vld [vmem:[#allocation13 + $0x38] sm:$0xf]
    %v1571 = vld [vmem:[#allocation13 + $0x3c] sm:$0xf]
    %v1572 = vld [vmem:[#allocation13 + $0x40] sm:$0xf]
    %v1573 = vld [vmem:[#allocation13 + $0x44] sm:$0xf]
    %v1574 = vld [vmem:[#allocation13 + $0x48] sm:$0xf]
    %v1575 = vld [vmem:[#allocation13 + $0x4c] sm:$0xf]
    %v1576 = vld [vmem:[#allocation13 + $0x50] sm:$0xf]
    %v1577 = vld [vmem:[#allocation13 + $0x54] sm:$0xf]
    %v1578 = vld [vmem:[#allocation13 + $0x58] sm:$0xf]
    %v1579 = vld [vmem:[#allocation13 + $0x5c] sm:$0xf]
    %v1580 = vld [vmem:[#allocation13 + $0x60] sm:$0xf]
    %v1581 = vld [vmem:[#allocation13 + $0x64] sm:$0xf]
    %v1582 = vld [vmem:[#allocation13 + $0x68] sm:$0xf]
    %v1583 = vld [vmem:[#allocation13 + $0x6c] sm:$0xf]
    %v1584 = vld [vmem:[#allocation13 + $0x70] sm:$0xf]
    %v1585 = vld [vmem:[#allocation13 + $0x74] sm:$0xf]
    %v1586 = vld [vmem:[#allocation13 + $0x78] sm:$0xf]
    %v1587 = vld [vmem:[#allocation13 + $0x7c] sm:$0xf]
    %v1620 = vunpack.c.l.b16 %v1556
    %v1621 = vunpack.c.l.b16 %v1557
    %v1622 = vunpack.c.l.b16 %v1558
    %v1623 = vunpack.c.l.b16 %v1559
    %v1624 = vunpack.c.l.b16 %v1560
    %v1625 = vunpack.c.l.b16 %v1561
    %v1626 = vunpack.c.l.b16 %v1562
    %v1627 = vunpack.c.l.b16 %v1563
    %v1628 = vunpack.c.l.b16 %v1564
    %v1629 = vunpack.c.l.b16 %v1565
    %v1630 = vunpack.c.l.b16 %v1566
    %v1631 = vunpack.c.l.b16 %v1567
    %v1632 = vunpack.c.l.b16 %v1568
    %v1633 = vunpack.c.l.b16 %v1569
    %v1634 = vunpack.c.l.b16 %v1570
    %v1635 = vunpack.c.l.b16 %v1571
    %v1636 = vunpack.c.l.b16 %v1572
    %v1637 = vunpack.c.l.b16 %v1573
    %v1638 = vunpack.c.l.b16 %v1574
    %v1639 = vunpack.c.l.b16 %v1575
    %v1640 = vunpack.c.l.b16 %v1576
    %v1641 = vunpack.c.l.b16 %v1577
    %v1642 = vunpack.c.l.b16 %v1578
    %v1643 = vunpack.c.l.b16 %v1579
    %v1644 = vunpack.c.l.b16 %v1580
    %v1645 = vunpack.c.l.b16 %v1581
    %v1646 = vunpack.c.l.b16 %v1582
    %v1647 = vunpack.c.l.b16 %v1583
    %v1648 = vunpack.c.l.b16 %v1584
    %v1649 = vunpack.c.l.b16 %v1585
    %v1650 = vunpack.c.l.b16 %v1586
    %v1651 = vunpack.c.l.b16 %v1587
    %v1652 = vpack.c.b16 %v1621, %v1620
    %v1653 = vpack.c.b16 %v1623, %v1622
    %v1654 = vpack.c.b16 %v1625, %v1624
    %v1655 = vpack.c.b16 %v1627, %v1626
    %v1656 = vpack.c.b16 %v1629, %v1628
    %v1657 = vpack.c.b16 %v1631, %v1630
    %v1658 = vpack.c.b16 %v1633, %v1632
    %v1659 = vpack.c.b16 %v1635, %v1634
    %v1660 = vpack.c.b16 %v1637, %v1636
    %v1661 = vpack.c.b16 %v1639, %v1638
    %v1662 = vpack.c.b16 %v1641, %v1640
    %v1663 = vpack.c.b16 %v1643, %v1642
    %v1664 = vpack.c.b16 %v1645, %v1644
    %v1665 = vpack.c.b16 %v1647, %v1646
    %v1666 = vpack.c.b16 %v1649, %v1648
    %v1667 = vpack.c.b16 %v1651, %v1650
    %1684 = vmatpush.bf16.msra.mxu0 %v1659
    %1685 = vmatpush.bf16.msra.mxu0 %v1658
    %1686 = vmatpush.bf16.msra.mxu0 %v1657
    %1687 = vmatpush.bf16.msra.mxu0 %v1656
    %1688 = vmatpush.bf16.msra.mxu0 %v1655
    %1689 = vmatpush.bf16.msra.mxu0 %v1654
    %1690 = vmatpush.bf16.msra.mxu0 %v1653
    %1691 = vmatpush.bf16.msra.mxu0 %v1652
    %1692 = vmatmul.bf16.gmra.mxu0 %v1554
    %v1693 = vpop.f32.mrf.mxu0
    %v1694 = vadd.f32 0.0, %v1693
    %v1695 = vpop.f32.mrf.mxu0
    %1696 = vdwg.mxu0
    %1697 = vmatpush.bf16.msra.mxu0 %v1667
    %1698 = vmatpush.bf16.msra.mxu0 %v1666
    %1699 = vmatpush.bf16.msra.mxu0 %v1665
    %1700 = vmatpush.bf16.msra.mxu0 %v1664
    %1701 = vmatpush.bf16.msra.mxu0 %v1663
    %1702 = vmatpush.bf16.msra.mxu0 %v1662
    %1703 = vmatpush.bf16.msra.mxu0 %v1661
    %1704 = vmatpush.bf16.msra.mxu0 %v1660
    %1705 = vmatmul.bf16.gmra.mxu0 %v1555
    %v1706 = vpop.f32.mrf.mxu0
    %v1707 = vadd.f32 %v1694, %v1706
    %v1708 = vpop.f32.mrf.mxu0
    %1709 = vdwg.mxu0
    %v1710 = vpack.c.bf16 %v1707, %v1707
    %v1711 = vld [vmem:[%s10] sm:$0x1]
    %v1713 = vpack.i.b16 %v1711, %v1711
    %v1715 = vperm.slane %v1713, 0
    %v1716 = vunpack.c.l.bf16 %v1710
    %v1717 = vunpack.c.l.bf16 %v1715
    %v1718 = vadd.f32 %v1716, %v1717
    %v1719 = vpack.c.bf16 %v1718, %v1718
    %1720 = vst [vmem:[%s11] sm:$0xf] %v1719
    // Predicated region
    $region78: #{ffnn_v2_forward.1} parent=1 // pred_check
      _
    $region79: #{ffnn_v2_forward.1} parent=1 // pred_check_branch
      %1722 = sbr.rel (0) target = $region81
    $region80: #{ffnn_v2_forward.1} parent=1 // pred_region
      _
    $region81: #{ffnn_v2_forward.1} parent=1 // pred_fallthru
      _
    // Predicated region
    $region82: #{ffnn_v2_forward.1} parent=1 // pred_check
      _
    $region83: #{ffnn_v2_forward.1} parent=1 // pred_check_branch
      %1724 = sbr.rel (0) target = $region85
    $region84: #{ffnn_v2_forward.1} parent=1 // pred_region
      _
    $region85: #{ffnn_v2_forward.1} parent=1 // pred_fallthru
      _
    %1725 = vsyncpa [#allocation3], 1
    %1726 = vsyncpa [#allocation5], 1
    %1727 = vsyncpa [#allocation8], 1
    %1728 = vsyncpa [#allocation11], 1
    %1729 = vsyncpa [#allocation14], 1

</llo_original>
